<compile_context>
chip_gen: v7x
topology: tpu7x:2x2x1
jax: 0.10.0
libtpu: 0.0.40
codegen_flags: <defaults>
</compile_context>

<pallas_src>
import functools
import math
from dataclasses import dataclass

import jax
import jax.numpy as jnp
from jax.experimental import pallas as pl
from jax.experimental.pallas import tpu as pltpu


# ----------------------------------------------------------------------------
# Config (synthetic, mirrors the fields the forward pass reads)
# ----------------------------------------------------------------------------
@dataclass
class Config:
    hidden_size: int = 32
    num_heads: int = 4
    intermediate_size: int = 64
    rms_eps: float = 1e-6
    attention_type: str = "full"
    input_layernorm: bool = True
    post_attention_layernorm: bool = False
    pre_ffnn_layernorm: bool = False
    post_ffnn_layernorm: bool = False
    residual_multiplier: float = 1.0


COMPUTE_DTYPE = jnp.bfloat16   # MXU operand dtype; accumulation is always f32
# TODO(synk): on v7x an fp8 weight path (wqkv/wo/wgu/wd) would roughly double MXU
#             throughput and halve weight DMA/VMEM; needs requantization support.


# ----------------------------------------------------------------------------
# Generation-dependent sizing
# ----------------------------------------------------------------------------
@functools.lru_cache(maxsize=1)
def _vmem_capacity_bytes():
    try:
        return int(pltpu.get_tpu_info().vmem_capacity_bytes)
    except Exception:
        return 64 * 1024 * 1024   # assume the most restrictive (v7x per-TC)


def _vmem_limit():
    if _vmem_capacity_bytes() >= 100 * 1024 * 1024:   # v5e / v6e (128 MiB)
        return 96 * 1024 * 1024
    return 48 * 1024 * 1024                           # v7x (64 MiB per TC)


def _row_tile_target():
    return 512 if _vmem_capacity_bytes() >= 100 * 1024 * 1024 else 256


def _pick_row_tile(rows, target):
    """Largest row tile <= target that divides rows (multiple of 8), else full rows."""
    if rows <= target:
        return rows
    t = (target // 8) * 8
    while t >= 8:
        if rows % t == 0:
            return t
        t -= 8
    return rows


def _rms_normalize(x, w, eps):
    # Matches torch RMSNorm: stats in f32, cast normalized x back to the input
    # dtype FIRST, then multiply by weight.
    xf = x.astype(jnp.float32)
    var = jnp.mean(xf * xf, axis=-1, keepdims=True)
    xn = (xf * jax.lax.rsqrt(var + eps)).astype(x.dtype)
    return w * xn


# ----------------------------------------------------------------------------
# Kernel 0: standalone RMSNorm (only used for the non-default norm placements)
# ----------------------------------------------------------------------------
def _rmsnorm_kernel(x_ref, w_ref, o_ref, *, eps):
    o_ref[...] = _rms_normalize(x_ref[...], w_ref[...], eps).astype(o_ref.dtype)


def rmsnorm(x2d, weight, eps):
    rows, H = x2d.shape
    rt = _pick_row_tile(rows, _row_tile_target())
    return pl.pallas_call(
        functools.partial(_rmsnorm_kernel, eps=eps),
        out_shape=jax.ShapeDtypeStruct((rows, H), x2d.dtype),
        grid=(rows // rt,),
        in_specs=[
            pl.BlockSpec((rt, H), lambda i: (i, 0)),
            pl.BlockSpec((1, H), lambda i: (0, 0)),
        ],
        out_specs=pl.BlockSpec((rt, H), lambda i: (i, 0)),
        compiler_params=pltpu.CompilerParams(
            dimension_semantics=("parallel",),
            vmem_limit_bytes=_vmem_limit()),
    )(x2d, weight.reshape(1, H))


# ----------------------------------------------------------------------------
# Kernel 1: fused (RMSNorm ->) QKV projection, one bf16 matmul with (H, 3H)
# ----------------------------------------------------------------------------
def _norm_qkv_kernel(x_ref, w_ref, wqkv_ref, o_ref, *, eps, do_norm):
    x = x_ref[...]
    h = _rms_normalize(x, w_ref[...], eps) if do_norm else x
    wqkv = wqkv_ref[...]
    o_ref[...] = jnp.dot(
        h.astype(wqkv.dtype), wqkv, preferred_element_type=jnp.float32
    ).astype(o_ref.dtype)


def fused_norm_qkv(x2d, ln_w, wqkv, eps, *, do_norm):
    rows, H = x2d.shape
    N = wqkv.shape[1]
    rt = _pick_row_tile(rows, _row_tile_target())
    return pl.pallas_call(
        functools.partial(_norm_qkv_kernel, eps=eps, do_norm=do_norm),
        out_shape=jax.ShapeDtypeStruct((rows, N), wqkv.dtype),
        grid=(rows // rt,),
        in_specs=[
            pl.BlockSpec((rt, H), lambda i: (i, 0)),
            pl.BlockSpec((1, H), lambda i: (0, 0)),
            pl.BlockSpec((H, N), lambda i: (0, 0)),
        ],
        out_specs=pl.BlockSpec((rt, N), lambda i: (i, 0)),
        compiler_params=pltpu.CompilerParams(
            dimension_semantics=("parallel",),
            vmem_limit_bytes=_vmem_limit()),
    )(x2d, ln_w.reshape(1, H), wqkv)


# ----------------------------------------------------------------------------
# Kernel 2: fused attention
#   grid = (batch, q-row tile); all heads per step; RoPE (sign folded into
#   sin*), softmax (scale folded into q, approx reciprocal), per-head scratch
#   writes at lane offset h*D, O-projection + residual epilogue.
# ----------------------------------------------------------------------------
def _attn_kernel(*refs, n_heads, head_dim, scale, res_mult, has_mask,
                 fuse_residual, q_tile):
    it = iter(refs)
    qkv_ref = next(it)                       # (S, 3H)   compute dtype
    cos_ref = next(it)                       # (S, D)    f32
    sin_ref = next(it)                       # (S, D)    f32, sign-folded sin*
    mask_ref = next(it) if has_mask else None        # (tq, S)  f32
    res_ref = next(it) if fuse_residual else None    # (tq, H)  residual dtype
    wo_ref = next(it)                        # (H, H)    compute dtype
    o_ref = next(it)                         # (tq, H)   output
    oh_scratch = next(it)                    # (tq, H)   VMEM, compute dtype

    D = head_dim
    half = D // 2
    H = n_heads * D
    tq = q_tile

    qt = pl.program_id(1)
    row0 = pl.multiple_of(qt * tq, tq)

    qkv = qkv_ref[...]                                   # (S, 3H)
    q_rows = qkv_ref[pl.ds(row0, tq), :]                 # (tq, 3H)
    cos_k = cos_ref[...]
    sin_k = sin_ref[...]
    cos_q = cos_ref[pl.ds(row0, tq), :]
    sin_q = sin_ref[pl.ds(row0, tq), :]
    if has_mask:
        mask = mask_ref[...].astype(jnp.float32)         # (tq, S)

    compute_dtype = qkv.dtype

    def rope(x, cos, sin):
        # sin is sign-folded: rotate_half(x)*sin == roll_half(x)*sin*
        xf = x.astype(jnp.float32)
        rolled = jnp.concatenate([xf[:, half:], xf[:, :half]], axis=-1)
        # TODO(synk): at production D (>=128) use pltpu.roll on the XLU slot.
        return xf * cos + rolled * sin

    for h in range(n_heads):                 # static unroll (small head count)
        # TODO(synk): at nH~32 convert to a flash-style head/KV-tiled loop.
        q_h = (rope(q_rows[:, h * D:(h + 1) * D], cos_q, sin_q)
               * scale).astype(compute_dtype)                       # (tq, D)
        k_h = rope(qkv[:, H + h * D:H + (h + 1) * D],
                   cos_k, sin_k).astype(compute_dtype)              # (S, D)
        v_h = qkv[:, 2 * H + h * D:2 * H + (h + 1) * D]             # (S, D)

        s = jax.lax.dot_general(                                    # (tq, S) f32
            q_h, k_h, (((1,), (1,)), ((), ())),
            preferred_element_type=jnp.float32)
        if has_mask:
            s = s + mask
        m = jnp.max(s, axis=-1, keepdims=True)
        p = jnp.exp(s - m)                                          # unnormalized
        l = jnp.sum(p, axis=-1, keepdims=True)                      # (tq, 1)
        o_un = jnp.dot(p.astype(compute_dtype), v_h,
                       preferred_element_type=jnp.float32)          # (tq, D)
        # per-head normalization via EUP approximate reciprocal
        oh_scratch[:, h * D:(h + 1) * D] = (
            o_un * pl.reciprocal(l, approx=True)).astype(oh_scratch.dtype)

    # lane-dense (tq, H) head slab -> O projection -> residual epilogue
    proj = jnp.dot(oh_scratch[...], wo_ref[...],
                   preferred_element_type=jnp.float32)
    if fuse_residual:
        out = res_ref[...].astype(jnp.float32) + proj * res_mult
    else:
        out = proj
    o_ref[...] = out.astype(o_ref.dtype)


def fused_attention(qkv, cos, sin_star, mask, residual, wo, *, num_heads,
                    scale, res_mult, fuse_residual):
    B, S, threeH = qkv.shape
    H = threeH // 3
    D = H // num_heads
    has_mask = mask is not None
    tq = _pick_row_tile(S, _row_tile_target())

    if has_mask and mask.ndim == 3 and mask.shape[0] == 1:
        mask = mask[0]

    in_specs = [
        pl.BlockSpec((None, S, threeH), lambda b, qt: (b, 0, 0)),
        pl.BlockSpec((S, D), lambda b, qt: (0, 0)),
        pl.BlockSpec((S, D), lambda b, qt: (0, 0)),
    ]
    operands = [qkv, cos, sin_star]
    if has_mask:
        if mask.ndim == 2:
            # single (S,S) mask shared by every batch step: no per-batch DMA
            in_specs.append(pl.BlockSpec((tq, S), lambda b, qt: (qt, 0)))
        else:
            in_specs.append(pl.BlockSpec((None, tq, S), lambda b, qt: (b, qt, 0)))
        operands.append(mask.astype(jnp.float32))
    if fuse_residual:
        in_specs.append(pl.BlockSpec((None, tq, H), lambda b, qt: (b, qt, 0)))
        operands.append(residual)
    in_specs.append(pl.BlockSpec((H, H), lambda b, qt: (0, 0)))
    operands.append(wo)

    return pl.pallas_call(
        functools.partial(_attn_kernel, n_heads=num_heads, head_dim=D,
                          scale=scale, res_mult=res_mult, has_mask=has_mask,
                          fuse_residual=fuse_residual, q_tile=tq),
        out_shape=jax.ShapeDtypeStruct((B, S, H), residual.dtype),
        grid=(B, S // tq),
        in_specs=in_specs,
        out_specs=pl.BlockSpec((None, tq, H), lambda b, qt: (b, qt, 0)),
        scratch_shapes=[pltpu.VMEM((tq, H), qkv.dtype)],
        compiler_params=pltpu.CompilerParams(
            dimension_semantics=("parallel", "parallel"),
            vmem_limit_bytes=_vmem_limit()),
    )(*operands)


# ----------------------------------------------------------------------------
# Kernel 3: fused (RMSNorm ->) SwiGLU MLP with fused (H, 2I) gate|up weight
#           (+ residual epilogue)
# ----------------------------------------------------------------------------
def _mlp_kernel(x_ref, lnw_ref, wgu_ref, wd_ref, o_ref, *,
                eps, do_norm, fuse_residual, res_mult, inter):
    x = x_ref[...]
    h = _rms_normalize(x, lnw_ref[...], eps) if do_norm else x   # f32
    wgu = wgu_ref[...]
    wd = wd_ref[...]
    hc = h.astype(wgu.dtype)
    gu = jnp.dot(hc, wgu, preferred_element_type=jnp.float32)    # (rt, 2I) f32
    g = gu[:, :inter]
    u = gu[:, inter:]
    act = (g * jax.nn.sigmoid(g)) * u                            # SwiGLU, f32
    down = jnp.dot(act.astype(wd.dtype), wd,
                   preferred_element_type=jnp.float32)
    if fuse_residual:
        # when pre-FFN norm is active the reference replaces `residual` with
        # the normed activation before the add, so `h` is the correct base.
        out = h.astype(jnp.float32) + down * res_mult
    else:
        out = down
    o_ref[...] = out.astype(o_ref.dtype)


def fused_mlp(x2d, ln_w, wgu, wd, eps, *, do_norm, fuse_residual, res_mult):
    rows, H = x2d.shape
    I2 = wgu.shape[1]
    rt = _pick_row_tile(rows, _row_tile_target())
    return pl.pallas_call(
        functools.partial(_mlp_kernel, eps=eps, do_norm=do_norm,
                          fuse_residual=fuse_residual, res_mult=res_mult,
                          inter=I2 // 2),
        out_shape=jax.ShapeDtypeStruct((rows, H), x2d.dtype),
        grid=(rows // rt,),
        in_specs=[
            pl.BlockSpec((rt, H), lambda i: (i, 0)),
            pl.BlockSpec((1, H), lambda i: (0, 0)),
            pl.BlockSpec((H, I2), lambda i: (0, 0)),
            pl.BlockSpec((I2 // 2, H), lambda i: (0, 0)),
        ],
        out_specs=pl.BlockSpec((rt, H), lambda i: (i, 0)),
        compiler_params=pltpu.CompilerParams(
            dimension_semantics=("parallel",),
            vmem_limit_bytes=_vmem_limit()),
    )(x2d, ln_w.reshape(1, H), wgu, wd)


# ----------------------------------------------------------------------------
# One-time parameter preparation (hoisted out of the forward pass)
# ----------------------------------------------------------------------------
def prepare_params(params, compute_dtype=COMPUTE_DTYPE):
    return {
        "ln_weight": params["ln_weight"].astype(jnp.float32),
        "wqkv": jnp.concatenate(
            [params["wq"], params["wk"], params["wv"]], axis=1
        ).astype(compute_dtype),
        "wo": params["wo"].astype(compute_dtype),
        "wgu": jnp.concatenate(
            [params["wg"], params["wu"]], axis=1).astype(compute_dtype),
        "wd": params["wd"].astype(compute_dtype),
    }


# ----------------------------------------------------------------------------
# Layer wiring
# ----------------------------------------------------------------------------
def layer_forward(prep, cfg: Config, x, position_embeddings, mask=None):
    B, S, H = x.shape
    nH = cfg.num_heads
    D = H // nH
    half = D // 2
    cos, sin = position_embeddings
    cos = cos.astype(jnp.float32)
    # fold the rotate-half sign into sin: rotate_half(x)*sin == roll_half(x)*sin*
    sin_star = jnp.concatenate(
        [-sin[:, :half], sin[:, half:]], axis=-1).astype(jnp.float32)
    ln_w = prep["ln_weight"]
    eps = cfg.rms_eps
    mult = cfg.residual_multiplier

    x2d = x.reshape(B * S, H)

    # (input RMSNorm ->) fused QKV projection (bf16 out, f32 accumulation)
    qkv = fused_norm_qkv(x2d, ln_w, prep["wqkv"], eps,
                         do_norm=cfg.input_layernorm)
    qkv = qkv.reshape(B, S, 3 * H)

    # attention (+ O proj, + residual epilogue when no post-attn norm)
    fuse_attn_res = not cfg.post_attention_layernorm
    attn = fused_attention(qkv, cos, sin_star, mask, x, prep["wo"],
                           num_heads=nH, scale=1.0 / math.sqrt(D),
                           res_mult=mult, fuse_residual=fuse_attn_res)
    if fuse_attn_res:
        residual = attn
    else:
        attn_out = rmsnorm(attn.reshape(B * S, H), ln_w, eps).reshape(B, S, H)
        residual = x + attn_out * mult

    # MLP (+ optional pre-FFN norm, + residual epilogue when no post-FFN norm)
    if cfg.post_ffnn_layernorm:
        if cfg.pre_ffnn_layernorm:
            residual = rmsnorm(residual.reshape(B * S, H), ln_w,
                               eps).reshape(B, S, H)
        mlp_out = fused_mlp(residual.reshape(B * S, H), ln_w,
                            prep["wgu"], prep["wd"], eps,
                            do_norm=False, fuse_residual=False, res_mult=mult)
        mlp_out = rmsnorm(mlp_out, ln_w, eps).reshape(B, S, H)
        residual = residual + mlp_out * mult
    else:
        out2d = fused_mlp(residual.reshape(B * S, H), ln_w,
                          prep["wgu"], prep["wd"], eps,
                          do_norm=cfg.pre_ffnn_layernorm,
                          fuse_residual=True, res_mult=mult)
        residual = out2d.reshape(B, S, H)
    return residual


# ----------------------------------------------------------------------------
# Deterministic parameter / input construction
# ----------------------------------------------------------------------------
def make_params(cfg: Config, key):
    H, I = cfg.hidden_size, cfg.intermediate_size
    ks = jax.random.split(key, 8)
    std = 0.02
    return {
        "ln_weight": jnp.ones((H,), jnp.float32),
        "wq": std * jax.random.normal(ks[0], (H, H), jnp.float32),
        "wk": std * jax.random.normal(ks[1], (H, H), jnp.float32),
        "wv": std * jax.random.normal(ks[2], (H, H), jnp.float32),
        "wo": std * jax.random.normal(ks[3], (H, H), jnp.float32),
        "wg": std * jax.random.normal(ks[4], (H, I), jnp.float32),
        "wu": std * jax.random.normal(ks[5], (H, I), jnp.float32),
        "wd": std * jax.random.normal(ks[6], (I, H), jnp.float32),
    }


def make_rope(seq_len, head_dim, base=10000.0):
    half = head_dim // 2
    inv_freq = 1.0 / (base ** (jnp.arange(0, half, dtype=jnp.float32) / half))
    t = jnp.arange(seq_len, dtype=jnp.float32)
    freqs = jnp.einsum("s,d->sd", t, inv_freq)          # (S, D/2)
    emb = jnp.concatenate([freqs, freqs], axis=-1)      # (S, D)
    return jnp.cos(emb), jnp.sin(emb)


if __name__ == "__main__":
    cfg = Config()
    key = jax.random.PRNGKey(0)
    k_params, k_x = jax.random.split(key)

    params = make_params(cfg, k_params)
    prep = prepare_params(params)           # hoisted: weight concat/cast once

    B, S, H = 2, 8, cfg.hidden_size
    x = jax.random.normal(k_x, (B, S, H), jnp.float32)
    cos, sin = make_rope(S, H // cfg.num_heads)

    # single (S, S) causal additive mask shared by all batches (no per-batch
    # dense mask DMA); mask=None path is also supported and skips all traffic.
    mask = jnp.where(
        jnp.tril(jnp.ones((S, S), jnp.bool_)), 0.0, -1e9).astype(jnp.float32)

    fwd = jax.jit(lambda p, xx, pe, m: layer_forward(p, cfg, xx, pe, m))
    out = fwd(prep, x, (cos, sin), mask)
    jax.block_until_ready(out)
    assert out.shape == (B, S, H)
    print("KERNEL_OK")
</pallas_src>

<mosaic_0001>
module attributes {stable_mosaic.version = 11 : i64} {
  func.func @_norm_qkv_kernel(%arg0: i32, %arg1: memref<16x32xf32, #tpu.memory_space<vmem>>, %arg2: memref<1x32xf32, #tpu.memory_space<vmem>>, %arg3: memref<32x96xbf16, #tpu.memory_space<vmem>>, %arg4: memref<16x96xbf16, #tpu.memory_space<vmem>>) attributes {dimension_semantics = [#tpu.dimension_semantics<parallel>], iteration_bounds = array<i64: 1>, scalar_prefetch = 0 : i64, scratch_operands = 0 : i64, tpu.core_type = #tpu.core_type<tc>, window_params = [{transform_indices = @transform_0, window_bounds = array<i64: 16, 32>}, {pipeline_mode = #tpu.pipeline_mode<synchronous>, transform_indices = @transform_1, window_bounds = array<i64: 1, 32>}, {pipeline_mode = #tpu.pipeline_mode<synchronous>, transform_indices = @transform_2, window_bounds = array<i64: 32, 96>}, {transform_indices = @transform_3, window_bounds = array<i64: 16, 96>}]} {
    %c0 = arith.constant 0 : index
    %c0_0 = arith.constant 0 : index
    %0 = vector.load %arg1[%c0, %c0_0] : memref<16x32xf32, #tpu.memory_space<vmem>>, vector<16x32xf32>
    %c0_1 = arith.constant 0 : index
    %c0_2 = arith.constant 0 : index
    %1 = vector.load %arg2[%c0_1, %c0_2] : memref<1x32xf32, #tpu.memory_space<vmem>>, vector<1x32xf32>
    %2 = arith.mulf %0, %0 : vector<16x32xf32>
    %cst = arith.constant dense<0.000000e+00> : vector<16xf32>
    %3 = vector.multi_reduction <add>, %2, %cst [1] : vector<16x32xf32> to vector<16xf32>
    %4 = vector.shape_cast %3 : vector<16xf32> to vector<16x1xf32>
    %cst_3 = arith.constant 3.200000e+01 : f32
    %5 = vector.broadcast %cst_3 : f32 to vector<16x1xf32>
    %6 = arith.divf %4, %5 : vector<16x1xf32>
    %cst_4 = arith.constant 9.99999997E-7 : f32
    %7 = vector.broadcast %cst_4 : f32 to vector<16x1xf32>
    %8 = arith.addf %6, %7 : vector<16x1xf32>
    %9 = math.rsqrt %8 : vector<16x1xf32>
    %10 = vector.broadcast %9 : vector<16x1xf32> to vector<16x32xf32>
    %11 = arith.mulf %0, %10 : vector<16x32xf32>
    %12 = vector.broadcast %1 : vector<1x32xf32> to vector<16x32xf32>
    %13 = arith.mulf %12, %11 : vector<16x32xf32>
    %c0_5 = arith.constant 0 : index
    %c0_6 = arith.constant 0 : index
    %14 = vector.load %arg3[%c0_5, %c0_6] : memref<32x96xbf16, #tpu.memory_space<vmem>>, vector<32x96xbf16>
    %15 = arith.truncf %13 : vector<16x32xf32> to vector<16x32xbf16>
    %cst_7 = arith.constant dense<0.000000e+00> : vector<16x96xf32>
    %16 = tpu.matmul %15, %14, %cst_7 {dimension_numbers = #tpu.dot_dimension_numbers<[1], [0], [0], [1], [0, 0, 1, 1], [], []>} : vector<16x32xbf16>, vector<32x96xbf16>, vector<16x96xf32> -> vector<16x96xf32>
    %17 = arith.truncf %16 : vector<16x96xf32> to vector<16x96xbf16>
    %c0_8 = arith.constant 0 : index
    %c0_9 = arith.constant 0 : index
    %18 = vector.load %arg4[%c0_8, %c0_9] : memref<16x96xbf16, #tpu.memory_space<vmem>>, vector<16x96xbf16>
    tpu.vector_store %arg4[%c0_8, %c0_9], %17 {strides = array<i32>} : memref<16x96xbf16, #tpu.memory_space<vmem>>, vector<16x96xbf16>,
    return
  }
  func.func @transform_0(%arg0: i32) -> (i32, i32) {
    %c0_i32 = arith.constant 0 : i32
    %c0_i32_0 = arith.constant 0 : i32
    return %arg0, %c0_i32 : i32, i32
  }
  func.func @transform_1(%arg0: i32) -> (i32, i32) {
    %c0_i32 = arith.constant 0 : i32
    %c0_i32_0 = arith.constant 0 : i32
    %c0_i32_1 = arith.constant 0 : i32
    return %c0_i32, %c0_i32_0 : i32, i32
  }
  func.func @transform_2(%arg0: i32) -> (i32, i32) {
    %c0_i32 = arith.constant 0 : i32
    %c0_i32_0 = arith.constant 0 : i32
    %c0_i32_1 = arith.constant 0 : i32
    return %c0_i32, %c0_i32_0 : i32, i32
  }
  func.func @transform_3(%arg0: i32) -> (i32, i32) {
    %c0_i32 = arith.constant 0 : i32
    %c0_i32_0 = arith.constant 0 : i32
    return %arg0, %c0_i32 : i32, i32
  }
}

module attributes {stable_mosaic.version = 11 : i64} {
  func.func @_attn_kernel(%arg0: i32, %arg1: i32, %arg2: memref<1x8x96xbf16, #tpu.memory_space<vmem>>, %arg3: memref<8x8xf32, #tpu.memory_space<vmem>>, %arg4: memref<8x8xf32, #tpu.memory_space<vmem>>, %arg5: memref<8x8xf32, #tpu.memory_space<vmem>>, %arg6: memref<1x8x32xf32, #tpu.memory_space<vmem>>, %arg7: memref<32x32xbf16, #tpu.memory_space<vmem>>, %arg8: memref<1x8x32xf32, #tpu.memory_space<vmem>>, %arg9: memref<8x32xbf16, #tpu.memory_space<vmem>>) attributes {dimension_semantics = [#tpu.dimension_semantics<parallel>, #tpu.dimension_semantics<parallel>], iteration_bounds = array<i64: 2, 1>, scalar_prefetch = 0 : i64, scratch_operands = 1 : i64, tpu.core_type = #tpu.core_type<tc>, window_params = [{transform_indices = @transform_0, window_bounds = array<i64: 1, 8, 96>}, {pipeline_mode = #tpu.pipeline_mode<synchronous>, transform_indices = @transform_1, window_bounds = array<i64: 8, 8>}, {pipeline_mode = #tpu.pipeline_mode<synchronous>, transform_indices = @transform_2, window_bounds = array<i64: 8, 8>}, {transform_indices = @transform_3, window_bounds = array<i64: 8, 8>}, {transform_indices = @transform_4, window_bounds = array<i64: 1, 8, 32>}, {pipeline_mode = #tpu.pipeline_mode<synchronous>, transform_indices = @transform_5, window_bounds = array<i64: 32, 32>}, {transform_indices = @transform_6, window_bounds = array<i64: 1, 8, 32>}]} {
    %c8_i32 = arith.constant 8 : i32
    %0 = arith.muli %arg1, %c8_i32 : i32
    %1 = tpu.assume_multiple %0, 8 : i32
    %c0 = arith.constant 0 : index
    %c0_0 = arith.constant 0 : index
    %c0_1 = arith.constant 0 : index
    %2 = vector.load %arg2[%c0, %c0_0, %c0_1] : memref<1x8x96xbf16, #tpu.memory_space<vmem>>, vector<1x8x96xbf16>
    %3 = vector.shape_cast %2 : vector<1x8x96xbf16> to vector<8x96xbf16>
    %c0_2 = arith.constant 0 : index
    %4 = arith.index_cast %1 : i32 to index
    %c0_3 = arith.constant 0 : index
    %5 = vector.load %arg2[%c0_2, %4, %c0_3] : memref<1x8x96xbf16, #tpu.memory_space<vmem>>, vector<1x8x96xbf16>
    %6 = vector.shape_cast %5 : vector<1x8x96xbf16> to vector<8x96xbf16>
    %c0_4 = arith.constant 0 : index
    %c0_5 = arith.constant 0 : index
    %7 = vector.load %arg3[%c0_4, %c0_5] : memref<8x8xf32, #tpu.memory_space<vmem>>, vector<8x8xf32>
    %c0_6 = arith.constant 0 : index
    %c0_7 = arith.constant 0 : index
    %8 = vector.load %arg4[%c0_6, %c0_7] : memref<8x8xf32, #tpu.memory_space<vmem>>, vector<8x8xf32>
    %9 = arith.index_cast %1 : i32 to index
    %c0_8 = arith.constant 0 : index
    %10 = vector.load %arg3[%9, %c0_8] : memref<8x8xf32, #tpu.memory_space<vmem>>, vector<8x8xf32>
    %11 = arith.index_cast %1 : i32 to index
    %c0_9 = arith.constant 0 : index
    %12 = vector.load %arg4[%11, %c0_9] : memref<8x8xf32, #tpu.memory_space<vmem>>, vector<8x8xf32>
    %c0_10 = arith.constant 0 : index
    %c0_11 = arith.constant 0 : index
    %13 = vector.load %arg5[%c0_10, %c0_11] : memref<8x8xf32, #tpu.memory_space<vmem>>, vector<8x8xf32>
    %14 = vector.extract_strided_slice %6 {offsets = [0, 0], sizes = [8, 8], strides = [1, 1]} : vector<8x96xbf16> to vector<8x8xbf16>
    %15 = arith.extf %14 : vector<8x8xbf16> to vector<8x8xf32>
    %16 = vector.extract_strided_slice %15 {offsets = [0, 4], sizes = [8, 4], strides = [1, 1]} : vector<8x8xf32> to vector<8x4xf32>
    %17 = vector.extract_strided_slice %15 {offsets = [0, 0], sizes = [8, 4], strides = [1, 1]} : vector<8x8xf32> to vector<8x4xf32>
    %18 = tpu.concatenate %16, %17 in 1 : vector<8x4xf32>, vector<8x4xf32> -> vector<8x8xf32>
    %19 = arith.mulf %15, %10 : vector<8x8xf32>
    %20 = arith.mulf %18, %12 : vector<8x8xf32>
    %21 = arith.addf %19, %20 : vector<8x8xf32>
    %cst = arith.constant 0.353553385 : f32
    %22 = vector.broadcast %cst : f32 to vector<8x8xf32>
    %23 = arith.mulf %21, %22 : vector<8x8xf32>
    %24 = arith.truncf %23 : vector<8x8xf32> to vector<8x8xbf16>
    %25 = vector.extract_strided_slice %3 {offsets = [0, 32], sizes = [8, 8], strides = [1, 1]} : vector<8x96xbf16> to vector<8x8xbf16>
    %26 = arith.extf %25 : vector<8x8xbf16> to vector<8x8xf32>
    %27 = vector.extract_strided_slice %26 {offsets = [0, 4], sizes = [8, 4], strides = [1, 1]} : vector<8x8xf32> to vector<8x4xf32>
    %28 = vector.extract_strided_slice %26 {offsets = [0, 0], sizes = [8, 4], strides = [1, 1]} : vector<8x8xf32> to vector<8x4xf32>
    %29 = tpu.concatenate %27, %28 in 1 : vector<8x4xf32>, vector<8x4xf32> -> vector<8x8xf32>
    %30 = arith.mulf %26, %7 : vector<8x8xf32>
    %31 = arith.mulf %29, %8 : vector<8x8xf32>
    %32 = arith.addf %30, %31 : vector<8x8xf32>
    %33 = arith.truncf %32 : vector<8x8xf32> to vector<8x8xbf16>
    %34 = vector.extract_strided_slice %3 {offsets = [0, 64], sizes = [8, 8], strides = [1, 1]} : vector<8x96xbf16> to vector<8x8xbf16>
    %cst_12 = arith.constant dense<0.000000e+00> : vector<8x8xf32>
    %35 = tpu.matmul %24, %33, %cst_12 {dimension_numbers = #tpu.dot_dimension_numbers<[1], [1], [0], [0], [0, 0, 1, 0], [], []>} : vector<8x8xbf16>, vector<8x8xbf16>, vector<8x8xf32> -> vector<8x8xf32>
    %36 = arith.addf %35, %13 : vector<8x8xf32>
    %cst_13 = arith.constant dense<0xFF800000> : vector<8xf32>
    %37 = vector.multi_reduction <maximumf>, %36, %cst_13 [1] : vector<8x8xf32> to vector<8xf32>
    %38 = vector.shape_cast %37 : vector<8xf32> to vector<8x1xf32>
    %39 = vector.broadcast %38 : vector<8x1xf32> to vector<8x8xf32>
    %40 = arith.subf %36, %39 : vector<8x8xf32>
    %41 = math.exp %40 : vector<8x8xf32>
    %cst_14 = arith.constant dense<0.000000e+00> : vector<8xf32>
    %42 = vector.multi_reduction <add>, %41, %cst_14 [1] : vector<8x8xf32> to vector<8xf32>
    %43 = vector.shape_cast %42 : vector<8xf32> to vector<8x1xf32>
    %44 = arith.truncf %41 : vector<8x8xf32> to vector<8x8xbf16>
    %cst_15 = arith.constant dense<0.000000e+00> : vector<8x8xf32>
    %45 = tpu.matmul %44, %34, %cst_15 {dimension_numbers = #tpu.dot_dimension_numbers<[1], [0], [0], [1], [0, 0, 1, 1], [], []>} : vector<8x8xbf16>, vector<8x8xbf16>, vector<8x8xf32> -> vector<8x8xf32>
    %46 = tpu.reciprocal %43 {approx = true} : vector<8x1xf32> -> vector<8x1xf32>
    %47 = vector.broadcast %46 : vector<8x1xf32> to vector<8x8xf32>
    %48 = arith.mulf %45, %47 : vector<8x8xf32>
    %49 = arith.truncf %48 : vector<8x8xf32> to vector<8x8xbf16>
    %c0_16 = arith.constant 0 : index
    %c0_17 = arith.constant 0 : index
    %50 = vector.load %arg9[%c0_16, %c0_17] : memref<8x32xbf16, #tpu.memory_space<vmem>>, vector<8x8xbf16>
    tpu.vector_store %arg9[%c0_16, %c0_17], %49 {strides = array<i32>} : memref<8x32xbf16, #tpu.memory_space<vmem>>, vector<8x8xbf16>,
    %51 = vector.extract_strided_slice %6 {offsets = [0, 8], sizes = [8, 8], strides = [1, 1]} : vector<8x96xbf16> to vector<8x8xbf16>
    %52 = arith.extf %51 : vector<8x8xbf16> to vector<8x8xf32>
    %53 = vector.extract_strided_slice %52 {offsets = [0, 4], sizes = [8, 4], strides = [1, 1]} : vector<8x8xf32> to vector<8x4xf32>
    %54 = vector.extract_strided_slice %52 {offsets = [0, 0], sizes = [8, 4], strides = [1, 1]} : vector<8x8xf32> to vector<8x4xf32>
    %55 = tpu.concatenate %53, %54 in 1 : vector<8x4xf32>, vector<8x4xf32> -> vector<8x8xf32>
    %56 = arith.mulf %52, %10 : vector<8x8xf32>
    %57 = arith.mulf %55, %12 : vector<8x8xf32>
    %58 = arith.addf %56, %57 : vector<8x8xf32>
    %cst_18 = arith.constant 0.353553385 : f32
    %59 = vector.broadcast %cst_18 : f32 to vector<8x8xf32>
    %60 = arith.mulf %58, %59 : vector<8x8xf32>
    %61 = arith.truncf %60 : vector<8x8xf32> to vector<8x8xbf16>
    %62 = vector.extract_strided_slice %3 {offsets = [0, 40], sizes = [8, 8], strides = [1, 1]} : vector<8x96xbf16> to vector<8x8xbf16>
    %63 = arith.extf %62 : vector<8x8xbf16> to vector<8x8xf32>
    %64 = vector.extract_strided_slice %63 {offsets = [0, 4], sizes = [8, 4], strides = [1, 1]} : vector<8x8xf32> to vector<8x4xf32>
    %65 = vector.extract_strided_slice %63 {offsets = [0, 0], sizes = [8, 4], strides = [1, 1]} : vector<8x8xf32> to vector<8x4xf32>
    %66 = tpu.concatenate %64, %65 in 1 : vector<8x4xf32>, vector<8x4xf32> -> vector<8x8xf32>
    %67 = arith.mulf %63, %7 : vector<8x8xf32>
    %68 = arith.mulf %66, %8 : vector<8x8xf32>
    %69 = arith.addf %67, %68 : vector<8x8xf32>
    %70 = arith.truncf %69 : vector<8x8xf32> to vector<8x8xbf16>
    %71 = vector.extract_strided_slice %3 {offsets = [0, 72], sizes = [8, 8], strides = [1, 1]} : vector<8x96xbf16> to vector<8x8xbf16>
    %cst_19 = arith.constant dense<0.000000e+00> : vector<8x8xf32>
    %72 = tpu.matmul %61, %70, %cst_19 {dimension_numbers = #tpu.dot_dimension_numbers<[1], [1], [0], [0], [0, 0, 1, 0], [], []>} : vector<8x8xbf16>, vector<8x8xbf16>, vector<8x8xf32> -> vector<8x8xf32>
    %73 = arith.addf %72, %13 : vector<8x8xf32>
    %cst_20 = arith.constant dense<0xFF800000> : vector<8xf32>
    %74 = vector.multi_reduction <maximumf>, %73, %cst_20 [1] : vector<8x8xf32> to vector<8xf32>
    %75 = vector.shape_cast %74 : vector<8xf32> to vector<8x1xf32>
    %76 = vector.broadcast %75 : vector<8x1xf32> to vector<8x8xf32>
    %77 = arith.subf %73, %76 : vector<8x8xf32>
    %78 = math.exp %77 : vector<8x8xf32>
    %cst_21 = arith.constant dense<0.000000e+00> : vector<8xf32>
    %79 = vector.multi_reduction <add>, %78, %cst_21 [1] : vector<8x8xf32> to vector<8xf32>
    %80 = vector.shape_cast %79 : vector<8xf32> to vector<8x1xf32>
    %81 = arith.truncf %78 : vector<8x8xf32> to vector<8x8xbf16>
    %cst_22 = arith.constant dense<0.000000e+00> : vector<8x8xf32>
    %82 = tpu.matmul %81, %71, %cst_22 {dimension_numbers = #tpu.dot_dimension_numbers<[1], [0], [0], [1], [0, 0, 1, 1], [], []>} : vector<8x8xbf16>, vector<8x8xbf16>, vector<8x8xf32> -> vector<8x8xf32>
    %83 = tpu.reciprocal %80 {approx = true} : vector<8x1xf32> -> vector<8x1xf32>
    %84 = vector.broadcast %83 : vector<8x1xf32> to vector<8x8xf32>
    %85 = arith.mulf %82, %84 : vector<8x8xf32>
    %86 = arith.truncf %85 : vector<8x8xf32> to vector<8x8xbf16>
    %c0_23 = arith.constant 0 : index
    %c8 = arith.constant 8 : index
    %87 = vector.load %arg9[%c0_23, %c8] : memref<8x32xbf16, #tpu.memory_space<vmem>>, vector<8x8xbf16>
    tpu.vector_store %arg9[%c0_23, %c8], %86 {strides = array<i32>} : memref<8x32xbf16, #tpu.memory_space<vmem>>, vector<8x8xbf16>,
    %88 = vector.extract_strided_slice %6 {offsets = [0, 16], sizes = [8, 8], strides = [1, 1]} : vector<8x96xbf16> to vector<8x8xbf16>
    %89 = arith.extf %88 : vector<8x8xbf16> to vector<8x8xf32>
    %90 = vector.extract_strided_slice %89 {offsets = [0, 4], sizes = [8, 4], strides = [1, 1]} : vector<8x8xf32> to vector<8x4xf32>
    %91 = vector.extract_strided_slice %89 {offsets = [0, 0], sizes = [8, 4], strides = [1, 1]} : vector<8x8xf32> to vector<8x4xf32>
    %92 = tpu.concatenate %90, %91 in 1 : vector<8x4xf32>, vector<8x4xf32> -> vector<8x8xf32>
    %93 = arith.mulf %89, %10 : vector<8x8xf32>
    %94 = arith.mulf %92, %12 : vector<8x8xf32>
    %95 = arith.addf %93, %94 : vector<8x8xf32>
    %cst_24 = arith.constant 0.353553385 : f32
    %96 = vector.broadcast %cst_24 : f32 to vector<8x8xf32>
    %97 = arith.mulf %95, %96 : vector<8x8xf32>
    %98 = arith.truncf %97 : vector<8x8xf32> to vector<8x8xbf16>
    %99 = vector.extract_strided_slice %3 {offsets = [0, 48], sizes = [8, 8], strides = [1, 1]} : vector<8x96xbf16> to vector<8x8xbf16>
    %100 = arith.extf %99 : vector<8x8xbf16> to vector<8x8xf32>
    %101 = vector.extract_strided_slice %100 {offsets = [0, 4], sizes = [8, 4], strides = [1, 1]} : vector<8x8xf32> to vector<8x4xf32>
    %102 = vector.extract_strided_slice %100 {offsets = [0, 0], sizes = [8, 4], strides = [1, 1]} : vector<8x8xf32> to vector<8x4xf32>
    %103 = tpu.concatenate %101, %102 in 1 : vector<8x4xf32>, vector<8x4xf32> -> vector<8x8xf32>
    %104 = arith.mulf %100, %7 : vector<8x8xf32>
    %105 = arith.mulf %103, %8 : vector<8x8xf32>
    %106 = arith.addf %104, %105 : vector<8x8xf32>
    %107 = arith.truncf %106 : vector<8x8xf32> to vector<8x8xbf16>
    %108 = vector.extract_strided_slice %3 {offsets = [0, 80], sizes = [8, 8], strides = [1, 1]} : vector<8x96xbf16> to vector<8x8xbf16>
    %cst_25 = arith.constant dense<0.000000e+00> : vector<8x8xf32>
    %109 = tpu.matmul %98, %107, %cst_25 {dimension_numbers = #tpu.dot_dimension_numbers<[1], [1], [0], [0], [0, 0, 1, 0], [], []>} : vector<8x8xbf16>, vector<8x8xbf16>, vector<8x8xf32> -> vector<8x8xf32>
    %110 = arith.addf %109, %13 : vector<8x8xf32>
    %cst_26 = arith.constant dense<0xFF800000> : vector<8xf32>
    %111 = vector.multi_reduction <maximumf>, %110, %cst_26 [1] : vector<8x8xf32> to vector<8xf32>
    %112 = vector.shape_cast %111 : vector<8xf32> to vector<8x1xf32>
    %113 = vector.broadcast %112 : vector<8x1xf32> to vector<8x8xf32>
    %114 = arith.subf %110, %113 : vector<8x8xf32>
    %115 = math.exp %114 : vector<8x8xf32>
    %cst_27 = arith.constant dense<0.000000e+00> : vector<8xf32>
    %116 = vector.multi_reduction <add>, %115, %cst_27 [1] : vector<8x8xf32> to vector<8xf32>
    %117 = vector.shape_cast %116 : vector<8xf32> to vector<8x1xf32>
    %118 = arith.truncf %115 : vector<8x8xf32> to vector<8x8xbf16>
    %cst_28 = arith.constant dense<0.000000e+00> : vector<8x8xf32>
    %119 = tpu.matmul %118, %108, %cst_28 {dimension_numbers = #tpu.dot_dimension_numbers<[1], [0], [0], [1], [0, 0, 1, 1], [], []>} : vector<8x8xbf16>, vector<8x8xbf16>, vector<8x8xf32> -> vector<8x8xf32>
    %120 = tpu.reciprocal %117 {approx = true} : vector<8x1xf32> -> vector<8x1xf32>
    %121 = vector.broadcast %120 : vector<8x1xf32> to vector<8x8xf32>
    %122 = arith.mulf %119, %121 : vector<8x8xf32>
    %123 = arith.truncf %122 : vector<8x8xf32> to vector<8x8xbf16>
    %c0_29 = arith.constant 0 : index
    %c16 = arith.constant 16 : index
    %124 = vector.load %arg9[%c0_29, %c16] : memref<8x32xbf16, #tpu.memory_space<vmem>>, vector<8x8xbf16>
    tpu.vector_store %arg9[%c0_29, %c16], %123 {strides = array<i32>} : memref<8x32xbf16, #tpu.memory_space<vmem>>, vector<8x8xbf16>,
    %125 = vector.extract_strided_slice %6 {offsets = [0, 24], sizes = [8, 8], strides = [1, 1]} : vector<8x96xbf16> to vector<8x8xbf16>
    %126 = arith.extf %125 : vector<8x8xbf16> to vector<8x8xf32>
    %127 = vector.extract_strided_slice %126 {offsets = [0, 4], sizes = [8, 4], strides = [1, 1]} : vector<8x8xf32> to vector<8x4xf32>
    %128 = vector.extract_strided_slice %126 {offsets = [0, 0], sizes = [8, 4], strides = [1, 1]} : vector<8x8xf32> to vector<8x4xf32>
    %129 = tpu.concatenate %127, %128 in 1 : vector<8x4xf32>, vector<8x4xf32> -> vector<8x8xf32>
    %130 = arith.mulf %126, %10 : vector<8x8xf32>
    %131 = arith.mulf %129, %12 : vector<8x8xf32>
    %132 = arith.addf %130, %131 : vector<8x8xf32>
    %cst_30 = arith.constant 0.353553385 : f32
    %133 = vector.broadcast %cst_30 : f32 to vector<8x8xf32>
    %134 = arith.mulf %132, %133 : vector<8x8xf32>
    %135 = arith.truncf %134 : vector<8x8xf32> to vector<8x8xbf16>
    %136 = vector.extract_strided_slice %3 {offsets = [0, 56], sizes = [8, 8], strides = [1, 1]} : vector<8x96xbf16> to vector<8x8xbf16>
    %137 = arith.extf %136 : vector<8x8xbf16> to vector<8x8xf32>
    %138 = vector.extract_strided_slice %137 {offsets = [0, 4], sizes = [8, 4], strides = [1, 1]} : vector<8x8xf32> to vector<8x4xf32>
    %139 = vector.extract_strided_slice %137 {offsets = [0, 0], sizes = [8, 4], strides = [1, 1]} : vector<8x8xf32> to vector<8x4xf32>
    %140 = tpu.concatenate %138, %139 in 1 : vector<8x4xf32>, vector<8x4xf32> -> vector<8x8xf32>
    %141 = arith.mulf %137, %7 : vector<8x8xf32>
    %142 = arith.mulf %140, %8 : vector<8x8xf32>
    %143 = arith.addf %141, %142 : vector<8x8xf32>
    %144 = arith.truncf %143 : vector<8x8xf32> to vector<8x8xbf16>
    %145 = vector.extract_strided_slice %3 {offsets = [0, 88], sizes = [8, 8], strides = [1, 1]} : vector<8x96xbf16> to vector<8x8xbf16>
    %cst_31 = arith.constant dense<0.000000e+00> : vector<8x8xf32>
    %146 = tpu.matmul %135, %144, %cst_31 {dimension_numbers = #tpu.dot_dimension_numbers<[1], [1], [0], [0], [0, 0, 1, 0], [], []>} : vector<8x8xbf16>, vector<8x8xbf16>, vector<8x8xf32> -> vector<8x8xf32>
    %147 = arith.addf %146, %13 : vector<8x8xf32>
    %cst_32 = arith.constant dense<0xFF800000> : vector<8xf32>
    %148 = vector.multi_reduction <maximumf>, %147, %cst_32 [1] : vector<8x8xf32> to vector<8xf32>
    %149 = vector.shape_cast %148 : vector<8xf32> to vector<8x1xf32>
    %150 = vector.broadcast %149 : vector<8x1xf32> to vector<8x8xf32>
    %151 = arith.subf %147, %150 : vector<8x8xf32>
    %152 = math.exp %151 : vector<8x8xf32>
    %cst_33 = arith.constant dense<0.000000e+00> : vector<8xf32>
    %153 = vector.multi_reduction <add>, %152, %cst_33 [1] : vector<8x8xf32> to vector<8xf32>
    %154 = vector.shape_cast %153 : vector<8xf32> to vector<8x1xf32>
    %155 = arith.truncf %152 : vector<8x8xf32> to vector<8x8xbf16>
    %cst_34 = arith.constant dense<0.000000e+00> : vector<8x8xf32>
    %156 = tpu.matmul %155, %145, %cst_34 {dimension_numbers = #tpu.dot_dimension_numbers<[1], [0], [0], [1], [0, 0, 1, 1], [], []>} : vector<8x8xbf16>, vector<8x8xbf16>, vector<8x8xf32> -> vector<8x8xf32>
    %157 = tpu.reciprocal %154 {approx = true} : vector<8x1xf32> -> vector<8x1xf32>
    %158 = vector.broadcast %157 : vector<8x1xf32> to vector<8x8xf32>
    %159 = arith.mulf %156, %158 : vector<8x8xf32>
    %160 = arith.truncf %159 : vector<8x8xf32> to vector<8x8xbf16>
    %c0_35 = arith.constant 0 : index
    %c24 = arith.constant 24 : index
    %161 = vector.load %arg9[%c0_35, %c24] : memref<8x32xbf16, #tpu.memory_space<vmem>>, vector<8x8xbf16>
    tpu.vector_store %arg9[%c0_35, %c24], %160 {strides = array<i32>} : memref<8x32xbf16, #tpu.memory_space<vmem>>, vector<8x8xbf16>,
    %c0_36 = arith.constant 0 : index
    %c0_37 = arith.constant 0 : index
    %162 = vector.load %arg9[%c0_36, %c0_37] : memref<8x32xbf16, #tpu.memory_space<vmem>>, vector<8x32xbf16>
    %c0_38 = arith.constant 0 : index
    %c0_39 = arith.constant 0 : index
    %163 = vector.load %arg7[%c0_38, %c0_39] : memref<32x32xbf16, #tpu.memory_space<vmem>>, vector<32x32xbf16>
    %cst_40 = arith.constant dense<0.000000e+00> : vector<8x32xf32>
    %164 = tpu.matmul %162, %163, %cst_40 {dimension_numbers = #tpu.dot_dimension_numbers<[1], [0], [0], [1], [0, 0, 1, 1], [], []>} : vector<8x32xbf16>, vector<32x32xbf16>, vector<8x32xf32> -> vector<8x32xf32>
    %c0_41 = arith.constant 0 : index
    %c0_42 = arith.constant 0 : index
    %c0_43 = arith.constant 0 : index
    %165 = vector.load %arg6[%c0_41, %c0_42, %c0_43] : memref<1x8x32xf32, #tpu.memory_space<vmem>>, vector<1x8x32xf32>
    %166 = vector.shape_cast %165 : vector<1x8x32xf32> to vector<8x32xf32>
    %cst_44 = arith.constant 1.000000e+00 : f32
    %167 = vector.broadcast %cst_44 : f32 to vector<8x32xf32>
    %168 = arith.mulf %164, %167 : vector<8x32xf32>
    %169 = arith.addf %166, %168 : vector<8x32xf32>
    %c0_45 = arith.constant 0 : index
    %c0_46 = arith.constant 0 : index
    %c0_47 = arith.constant 0 : index
    %170 = vector.load %arg8[%c0_45, %c0_46, %c0_47] : memref<1x8x32xf32, #tpu.memory_space<vmem>>, vector<1x8x32xf32>
    %171 = vector.shape_cast %170 : vector<1x8x32xf32> to vector<8x32xf32>
    %172 = vector.shape_cast %169 : vector<8x32xf32> to vector<1x8x32xf32>
    tpu.vector_store %arg8[%c0_45, %c0_46, %c0_47], %172 {strides = array<i32>} : memref<1x8x32xf32, #tpu.memory_space<vmem>>, vector<1x8x32xf32>,
    return
  }
  func.func @transform_0(%arg0: i32, %arg1: i32) -> (i32, i32, i32) {
    %c0_i32 = arith.constant 0 : i32
    %c0_i32_0 = arith.constant 0 : i32
    %c0_i32_1 = arith.constant 0 : i32
    return %arg0, %c0_i32, %c0_i32_0 : i32, i32, i32
  }
  func.func @transform_1(%arg0: i32, %arg1: i32) -> (i32, i32) {
    %c0_i32 = arith.constant 0 : i32
    %c0_i32_0 = arith.constant 0 : i32
    %c0_i32_1 = arith.constant 0 : i32
    return %c0_i32, %c0_i32_0 : i32, i32
  }
  func.func @transform_2(%arg0: i32, %arg1: i32) -> (i32, i32) {
    %c0_i32 = arith.constant 0 : i32
    %c0_i32_0 = arith.constant 0 : i32
    %c0_i32_1 = arith.constant 0 : i32
    return %c0_i32, %c0_i32_0 : i32, i32
  }
  func.func @transform_3(%arg0: i32, %arg1: i32) -> (i32, i32) {
    %c0_i32 = arith.constant 0 : i32
    %c0_i32_0 = arith.constant 0 : i32
    return %arg1, %c0_i32 : i32, i32
  }
  func.func @transform_4(%arg0: i32, %arg1: i32) -> (i32, i32, i32) {
    %c0_i32 = arith.constant 0 : i32
    %c0_i32_0 = arith.constant 0 : i32
    return %arg0, %arg1, %c0_i32 : i32, i32, i32
  }
  func.func @transform_5(%arg0: i32, %arg1: i32) -> (i32, i32) {
    %c0_i32 = arith.constant 0 : i32
    %c0_i32_0 = arith.constant 0 : i32
    %c0_i32_1 = arith.constant 0 : i32
    return %c0_i32, %c0_i32_0 : i32, i32
  }
  func.func @transform_6(%arg0: i32, %arg1: i32) -> (i32, i32, i32) {
    %c0_i32 = arith.constant 0 : i32
    %c0_i32_0 = arith.constant 0 : i32
    return %arg0, %arg1, %c0_i32 : i32, i32, i32
  }
}

module attributes {stable_mosaic.version = 11 : i64} {
  func.func @_mlp_kernel(%arg0: i32, %arg1: memref<16x32xf32, #tpu.memory_space<vmem>>, %arg2: memref<1x32xf32, #tpu.memory_space<vmem>>, %arg3: memref<32x128xbf16, #tpu.memory_space<vmem>>, %arg4: memref<64x32xbf16, #tpu.memory_space<vmem>>, %arg5: memref<16x32xf32, #tpu.memory_space<vmem>>) attributes {dimension_semantics = [#tpu.dimension_semantics<parallel>], iteration_bounds = array<i64: 1>, scalar_prefetch = 0 : i64, scratch_operands = 0 : i64, tpu.core_type = #tpu.core_type<tc>, window_params = [{transform_indices = @transform_0, window_bounds = array<i64: 16, 32>}, {pipeline_mode = #tpu.pipeline_mode<synchronous>, transform_indices = @transform_1, window_bounds = array<i64: 1, 32>}, {pipeline_mode = #tpu.pipeline_mode<synchronous>, transform_indices = @transform_2, window_bounds = array<i64: 32, 128>}, {pipeline_mode = #tpu.pipeline_mode<synchronous>, transform_indices = @transform_3, window_bounds = array<i64: 64, 32>}, {transform_indices = @transform_4, window_bounds = array<i64: 16, 32>}]} {
    %c0 = arith.constant 0 : index
    %c0_0 = arith.constant 0 : index
    %0 = vector.load %arg1[%c0, %c0_0] : memref<16x32xf32, #tpu.memory_space<vmem>>, vector<16x32xf32>
    %c0_1 = arith.constant 0 : index
    %c0_2 = arith.constant 0 : index
    %1 = vector.load %arg3[%c0_1, %c0_2] : memref<32x128xbf16, #tpu.memory_space<vmem>>, vector<32x128xbf16>
    %c0_3 = arith.constant 0 : index
    %c0_4 = arith.constant 0 : index
    %2 = vector.load %arg4[%c0_3, %c0_4] : memref<64x32xbf16, #tpu.memory_space<vmem>>, vector<64x32xbf16>
    %3 = arith.truncf %0 : vector<16x32xf32> to vector<16x32xbf16>
    %cst = arith.constant dense<0.000000e+00> : vector<16x128xf32>
    %4 = tpu.matmul %3, %1, %cst {dimension_numbers = #tpu.dot_dimension_numbers<[1], [0], [0], [1], [0, 0, 1, 1], [], []>} : vector<16x32xbf16>, vector<32x128xbf16>, vector<16x128xf32> -> vector<16x128xf32>
    %5 = vector.extract_strided_slice %4 {offsets = [0, 0], sizes = [16, 64], strides = [1, 1]} : vector<16x128xf32> to vector<16x64xf32>
    %6 = vector.extract_strided_slice %4 {offsets = [0, 64], sizes = [16, 64], strides = [1, 1]} : vector<16x128xf32> to vector<16x64xf32>
    %7 = arith.negf %5 : vector<16x64xf32>
    %8 = math.exp %7 : vector<16x64xf32>
    %cst_5 = arith.constant 1.000000e+00 : f32
    %9 = vector.broadcast %cst_5 : f32 to vector<16x64xf32>
    %10 = arith.addf %9, %8 : vector<16x64xf32>
    %11 = arith.divf %9, %10 : vector<16x64xf32>
    %12 = arith.mulf %5, %11 : vector<16x64xf32>
    %13 = arith.mulf %12, %6 : vector<16x64xf32>
    %14 = arith.truncf %13 : vector<16x64xf32> to vector<16x64xbf16>
    %cst_6 = arith.constant dense<0.000000e+00> : vector<16x32xf32>
    %15 = tpu.matmul %14, %2, %cst_6 {dimension_numbers = #tpu.dot_dimension_numbers<[1], [0], [0], [1], [0, 0, 1, 1], [], []>} : vector<16x64xbf16>, vector<64x32xbf16>, vector<16x32xf32> -> vector<16x32xf32>
    %cst_7 = arith.constant 1.000000e+00 : f32
    %16 = vector.broadcast %cst_7 : f32 to vector<16x32xf32>
    %17 = arith.mulf %15, %16 : vector<16x32xf32>
    %18 = arith.addf %0, %17 : vector<16x32xf32>
    %c0_8 = arith.constant 0 : index
    %c0_9 = arith.constant 0 : index
    %19 = vector.load %arg5[%c0_8, %c0_9] : memref<16x32xf32, #tpu.memory_space<vmem>>, vector<16x32xf32>
    tpu.vector_store %arg5[%c0_8, %c0_9], %18 {strides = array<i32>} : memref<16x32xf32, #tpu.memory_space<vmem>>, vector<16x32xf32>,
    return
  }
  func.func @transform_0(%arg0: i32) -> (i32, i32) {
    %c0_i32 = arith.constant 0 : i32
    %c0_i32_0 = arith.constant 0 : i32
    return %arg0, %c0_i32 : i32, i32
  }
  func.func @transform_1(%arg0: i32) -> (i32, i32) {
    %c0_i32 = arith.constant 0 : i32
    %c0_i32_0 = arith.constant 0 : i32
    %c0_i32_1 = arith.constant 0 : i32
    return %c0_i32, %c0_i32_0 : i32, i32
  }
  func.func @transform_2(%arg0: i32) -> (i32, i32) {
    %c0_i32 = arith.constant 0 : i32
    %c0_i32_0 = arith.constant 0 : i32
    %c0_i32_1 = arith.constant 0 : i32
    return %c0_i32, %c0_i32_0 : i32, i32
  }
  func.func @transform_3(%arg0: i32) -> (i32, i32) {
    %c0_i32 = arith.constant 0 : i32
    %c0_i32_0 = arith.constant 0 : i32
    %c0_i32_1 = arith.constant 0 : i32
    return %c0_i32, %c0_i32_0 : i32, i32
  }
  func.func @transform_4(%arg0: i32) -> (i32, i32) {
    %c0_i32 = arith.constant 0 : i32
    %c0_i32_0 = arith.constant 0 : i32
    return %arg0, %c0_i32 : i32, i32
  }
}

</mosaic_0001>

<llo_original>
// kernel: _lambda_.3
$region0: #{_lambda_.3}
  #allocation0 [shape = 'u32[]', space=smem, size = 0x4, offset = 0x4, fixed_abs, tag = 'smem constant byte address 0x4 - core index']
  #allocation1 [shape = 'u32[144,128]{1,0:T(1,128)}', space=vmem, size = 0x12000, scoped, tag = 'internal scratch']
  %s0 = inlined_call_operand.vmem [shape: f32[16,32], index: 0, kind: input, shape index: {}]
  %s1 = inlined_call_operand.vmem [shape: f32[1,32], index: 1, kind: input, shape index: {}]
  %s2 = inlined_call_operand.hbm [shape: bf16[32,96], index: 2, kind: input, shape index: {}]
  %s3 = inlined_call_operand.vmem [shape: bf16[16,96], index: 3, kind: output, shape index: {}]
  %s4 = sld [smem:[#allocation0]]
  $region26: #{_lambda_.3} parent=0
    _
  %s6 = ssub.s32 1, %s4
  %s7 = scalar_select 0, %s6, %s4
  $region1: #{_lambda_.3} parent=0
    #allocation2 [shape = 'u8[8192]{0}', space=vmem, size = 0x2000, scoped, tag = 'input window, operand 2, single buffered']
    #allocation3 [shape = 's32[1]{0}', space=sflag, size = 0x4, scoped, tag = 'scoped memory for _lambda_.3']
    %8 = vsyncpa [#allocation3], 0
    // Predicated region
    $region2: #{_lambda_.3} parent=1 // pred_check
      _
    $region3: #{_lambda_.3} parent=1 // pred_check_branch
      %10 = sbr.rel (0) target = $region5
    $region4: #{_lambda_.3} parent=1 // pred_region
      _
    $region5: #{_lambda_.3} parent=1 // pred_fallthru
      _
    // Predicated region
    $region6: #{_lambda_.3} parent=1 // pred_check
      _
    $region7: #{_lambda_.3} parent=1 // pred_check_branch
      %12 = sbr.rel (0) target = $region9
    $region8: #{_lambda_.3} parent=1 // pred_region
      _
    $region9: #{_lambda_.3} parent=1 // pred_fallthru
      _
    // Predicated region
    $region10: #{_lambda_.3} parent=1 // pred_check
      _
    $region11: #{_lambda_.3} parent=1 // pred_check_branch
      %14 = sbr.rel (0) target = $region13
    $region12: #{_lambda_.3} parent=1 // pred_region
      %s16 = ssub.s32 256, 256
      %17 = vsyncadd [#allocation3], %s16
      %s18 = sshll.u32 [#allocation2], 4
      %s19 = int_to_ptr.vmem [resolvable:$true] %s18
      %24 = dma.hbm_to_vmem [thread:$0]  %s2, 256, %s19, [#allocation3], 64, 64, 4
    $region13: #{_lambda_.3} parent=1 // pred_fallthru
      _
    // Predicated region
    $region14: #{_lambda_.3} parent=1 // pred_check
      _
    $region15: #{_lambda_.3} parent=1 // pred_check_branch
      %26 = sbr.rel (0) target = $region17
    $region16: #{_lambda_.3} parent=1 // pred_region
      %27 = dma.done [#allocation3], 256
    $region17: #{_lambda_.3} parent=1 // pred_fallthru
      _
    %v29 = vld [vmem:[%s0] sm:$0xff]
    %v30 = vld [vmem:[%s0 + $0x8] sm:$0xff]
    %v31 = vld [vmem:[%s1] sm:$0x1]
    %v32 = vmul.f32 %v29, %v29
    %v33 = vmul.f32 %v30, %v30
    %vm34 = vcmask 261120
    %v35 = vsel %vm34, %v32, 0.0
    %36 = vadd.xlane.f32.xlu0 %v35
    %v37 = vpop.xlane.xlu0 %36
    %v38 = vsel %vm34, %v33, 0.0
    %39 = vadd.xlane.f32.xlu0 %v38
    %v40 = vpop.xlane.xlu0 %39
    %v41 = vrcp.pop 32.0
    %v42 = vmul.f32 %v37, %v41
    %v43 = vmul.f32 %v40, %v41
    %v44 = vadd.f32 %v42, 1e-06
    %v45 = vadd.f32 %v43, 1e-06
    %v46 = vrsqrt.pop %v44
    %v47 = vrsqrt.pop %v45
    %v48 = vmul.f32 %v29, %v46
    %v49 = vmul.f32 %v30, %v47
    %v51 = vlaneseq
    %v52 = vshrl.u32 %v51, 7
    %v53 = vsub.s32 0, %v52
    %v54 = vrot.slane %v31, %v53
    %v56 = vmul.f32 %v54, %v48
    %v57 = vmul.f32 %v54, %v49
    %v58 = vld [vmem:[#allocation2] sm:$0xf]
    %v59 = vld [vmem:[#allocation2 + $0x4] sm:$0xf]
    %v60 = vld [vmem:[#allocation2 + $0x8] sm:$0xf]
    %v61 = vld [vmem:[#allocation2 + $0xc] sm:$0xf]
    %v62 = vpack.c.bf16 %v57, %v56
    %v67 = vunpack.c.l.b16 %v58
    %v68 = vunpack.c.l.b16 %v59
    %v69 = vunpack.c.l.b16 %v60
    %v70 = vunpack.c.l.b16 %v61
    %v71 = vpack.c.b16 %v68, %v67
    %v72 = vpack.c.b16 %v70, %v69
    %v76 = vsel %vm34, %v62, 0
    %78 = vmatprep.subr.bf16.mxu0 0
    %79 = vmatpush1.bf16.msra.mxu0 %v71
    %80 = vmatprep.subr.bf16.mxu0 0
    %81 = vmatpush1.bf16.msra.mxu0 %v72
    %82 = vmatprep.subr.bf16.mxu0 0
    %83 = vmatpush1.bf16.msra.mxu0 0
    %84 = vmatprep.subr.bf16.mxu0 0
    %85 = vmatpush1.bf16.msra.mxu0 0
    %86 = vmatprep.subr.bf16.mxu0 0
    %87 = vmatpush1.bf16.msra.mxu0 0
    %88 = vmatprep.subr.bf16.mxu0 0
    %89 = vmatpush1.bf16.msra.mxu0 0
    %90 = vmatprep.subr.bf16.mxu0 0
    %91 = vmatpush1.bf16.msra.mxu0 0
    %92 = vmatprep.subr.bf16.mxu0 0
    %93 = vmatpush1.bf16.msra.mxu0 0
    %94 = vmatprep.subr.bf16.mxu0 0
    %95 = vmatpush1.bf16.msra.mxu0 0
    %96 = vmatprep.subr.bf16.mxu0 0
    %97 = vmatpush1.bf16.msra.mxu0 0
    %98 = vmatprep.subr.bf16.mxu0 0
    %99 = vmatpush1.bf16.msra.mxu0 0
    %100 = vmatprep.subr.bf16.mxu0 0
    %101 = vmatpush1.bf16.msra.mxu0 0
    %102 = vmatprep.subr.bf16.mxu0 0
    %103 = vmatpush1.bf16.msra.mxu0 0
    %104 = vmatprep.subr.bf16.mxu0 0
    %105 = vmatpush1.bf16.msra.mxu0 0
    %106 = vmatprep.subr.bf16.mxu0 0
    %107 = vmatpush1.bf16.msra.mxu0 0
    %108 = vmatprep.subr.bf16.mxu0 0
    %109 = vmatpush1.bf16.msra.mxu0 0
    %110 = vmatprep.mubr.bf16.mxu0 0
    %111 = vmatmul.mubr.bf16.gmra.mrb[0].mxu0 %v76
    %v112 = vpop.f32.mrb[0].mxu0
    %v113 = vadd.f32 0.0, %v112
    %v114 = vpop.f32.mrb[0].mxu0
    %v115 = vpop.f32.mrb[0].mxu0
    %v116 = vadd.f32 0.0, %v115
    %v117 = vpop.f32.mrb[0].mxu0
    %118 = vdwg.mxu0
    %v119 = vpack.c.bf16 %v116, %v113
    %v121 = vunpack.c.l.b16 %v119
    %v122 = vunpack.c.h.b16 %v119
    %v123 = vpack.c.b16 %v121, %v121
    %v124 = vpack.c.b16 %v122, %v122
    %vm127 = vcmask 781312
    %128 = vst.msk [vmem:[%s3] sm:$0xf] %vm127, %v123
    %129 = vst.msk [vmem:[%s3 + $0x4] sm:$0xf] %vm127, %v124
    // Predicated region
    $region18: #{_lambda_.3} parent=1 // pred_check
      _
    $region19: #{_lambda_.3} parent=1 // pred_check_branch
      %131 = sbr.rel (0) target = $region21
    $region20: #{_lambda_.3} parent=1 // pred_region
      _
    $region21: #{_lambda_.3} parent=1 // pred_fallthru
      _
    // Predicated region
    $region22: #{_lambda_.3} parent=1 // pred_check
      _
    $region23: #{_lambda_.3} parent=1 // pred_check_branch
      %133 = sbr.rel (0) target = $region25
    $region24: #{_lambda_.3} parent=1 // pred_region
      _
    $region25: #{_lambda_.3} parent=1 // pred_fallthru
      _
    %134 = vsyncpa [#allocation3], 1

// kernel: _lambda_.5
$region0: #{_lambda_.5}
  #allocation0 [shape = 'u32[]', space=smem, size = 0x4, offset = 0x4, fixed_abs, tag = 'smem constant byte address 0x4 - core index']
  #allocation1 [shape = 'u32[144,128]{1,0:T(1,128)}', space=vmem, size = 0x12000, scoped, tag = 'internal scratch']
  %s0 = inlined_call_operand.vmem [shape: f32[16,32], index: 0, kind: input, shape index: {}]
  %s1 = inlined_call_operand.vmem [shape: f32[1,32], index: 1, kind: input, shape index: {}]
  %s2 = inlined_call_operand.vmem [shape: bf16[32,128], index: 2, kind: input, shape index: {}]
  %s3 = inlined_call_operand.vmem [shape: bf16[64,32], index: 3, kind: input, shape index: {}]
  %s4 = inlined_call_operand.hbm [shape: f32[16,32], index: 4, kind: output, shape index: {}]
  %s5 = sld [smem:[#allocation0]]
  $region26: #{_lambda_.5} parent=0
    _
  %s7 = ssub.s32 1, %s5
  %s8 = scalar_select 0, %s7, %s5
  $region1: #{_lambda_.5} parent=0
    #allocation2 [shape = 'u8[8192]{0}', space=vmem, size = 0x2000, scoped, tag = 'output window, operand 0, single buffered']
    #allocation3 [shape = 's32[1]{0}', space=sflag, size = 0x4, scoped, tag = 'scoped memory for _lambda_.5']
    %9 = vsyncpa [#allocation3], 0
    // Predicated region
    $region2: #{_lambda_.5} parent=1 // pred_check
      _
    $region3: #{_lambda_.5} parent=1 // pred_check_branch
      %11 = sbr.rel (0) target = $region5
    $region4: #{_lambda_.5} parent=1 // pred_region
      _
    $region5: #{_lambda_.5} parent=1 // pred_fallthru
      _
    // Predicated region
    $region6: #{_lambda_.5} parent=1 // pred_check
      _
    $region7: #{_lambda_.5} parent=1 // pred_check_branch
      %13 = sbr.rel (0) target = $region9
    $region8: #{_lambda_.5} parent=1 // pred_region
      _
    $region9: #{_lambda_.5} parent=1 // pred_fallthru
      _
    // Predicated region
    $region10: #{_lambda_.5} parent=1 // pred_check
      _
    $region11: #{_lambda_.5} parent=1 // pred_check_branch
      %15 = sbr.rel (0) target = $region13
    $region12: #{_lambda_.5} parent=1 // pred_region
      _
    $region13: #{_lambda_.5} parent=1 // pred_fallthru
      _
    // Predicated region
    $region14: #{_lambda_.5} parent=1 // pred_check
      _
    $region15: #{_lambda_.5} parent=1 // pred_check_branch
      %17 = sbr.rel (0) target = $region17
    $region16: #{_lambda_.5} parent=1 // pred_region
      _
    $region17: #{_lambda_.5} parent=1 // pred_fallthru
      _
    %v19 = vld [vmem:[%s0] sm:$0xff]
    %v20 = vld [vmem:[%s0 + $0x8] sm:$0xff]
    %v21 = vld [vmem:[%s2] sm:$0xf]
    %v22 = vld [vmem:[%s2 + $0x4] sm:$0xf]
    %v23 = vld [vmem:[%s2 + $0x8] sm:$0xf]
    %v24 = vld [vmem:[%s2 + $0xc] sm:$0xf]
    %v25 = vld [vmem:[%s3] sm:$0xf]
    %v26 = vld [vmem:[%s3 + $0x4] sm:$0xf]
    %v27 = vld [vmem:[%s3 + $0x8] sm:$0xf]
    %v28 = vld [vmem:[%s3 + $0xc] sm:$0xf]
    %v29 = vld [vmem:[%s3 + $0x10] sm:$0xf]
    %v30 = vld [vmem:[%s3 + $0x14] sm:$0xf]
    %v31 = vld [vmem:[%s3 + $0x18] sm:$0xf]
    %v32 = vld [vmem:[%s3 + $0x1c] sm:$0xf]
    %v33 = vpack.c.bf16 %v20, %v19
    %v38 = vunpack.c.l.b16 %v21
    %v39 = vunpack.c.l.b16 %v22
    %v40 = vunpack.c.l.b16 %v23
    %v41 = vunpack.c.l.b16 %v24
    %v42 = vpack.c.b16 %v39, %v38
    %v43 = vpack.c.b16 %v41, %v40
    %vm46 = vcmask 261120
    %v48 = vsel %vm46, %v33, 0
    %50 = vmatprep.subr.bf16.mxu0 0
    %51 = vmatpush1.bf16.msra.mxu0 %v42
    %52 = vmatprep.subr.bf16.mxu0 0
    %53 = vmatpush1.bf16.msra.mxu0 %v43
    %54 = vmatprep.subr.bf16.mxu0 0
    %55 = vmatpush1.bf16.msra.mxu0 0
    %56 = vmatprep.subr.bf16.mxu0 0
    %57 = vmatpush1.bf16.msra.mxu0 0
    %58 = vmatprep.subr.bf16.mxu0 0
    %59 = vmatpush1.bf16.msra.mxu0 0
    %60 = vmatprep.subr.bf16.mxu0 0
    %61 = vmatpush1.bf16.msra.mxu0 0
    %62 = vmatprep.subr.bf16.mxu0 0
    %63 = vmatpush1.bf16.msra.mxu0 0
    %64 = vmatprep.subr.bf16.mxu0 0
    %65 = vmatpush1.bf16.msra.mxu0 0
    %66 = vmatprep.subr.bf16.mxu0 0
    %67 = vmatpush1.bf16.msra.mxu0 0
    %68 = vmatprep.subr.bf16.mxu0 0
    %69 = vmatpush1.bf16.msra.mxu0 0
    %70 = vmatprep.subr.bf16.mxu0 0
    %71 = vmatpush1.bf16.msra.mxu0 0
    %72 = vmatprep.subr.bf16.mxu0 0
    %73 = vmatpush1.bf16.msra.mxu0 0
    %74 = vmatprep.subr.bf16.mxu0 0
    %75 = vmatpush1.bf16.msra.mxu0 0
    %76 = vmatprep.subr.bf16.mxu0 0
    %77 = vmatpush1.bf16.msra.mxu0 0
    %78 = vmatprep.subr.bf16.mxu0 0
    %79 = vmatpush1.bf16.msra.mxu0 0
    %80 = vmatprep.subr.bf16.mxu0 0
    %81 = vmatpush1.bf16.msra.mxu0 0
    %82 = vmatprep.mubr.bf16.mxu0 0
    %83 = vmatmul.mubr.bf16.gmra.mrb[0].mxu0 %v48
    %v84 = vpop.f32.mrb[0].mxu0
    %v85 = vadd.f32 0.0, %v84
    %v86 = vpop.f32.mrb[0].mxu0
    %v87 = vpop.f32.mrb[0].mxu0
    %v88 = vadd.f32 0.0, %v87
    %v89 = vpop.f32.mrb[0].mxu0
    %90 = vdwg.mxu0
    %v91 = vxor.u32 %v85, 2147483648
    %v92 = vxor.u32 %v88, 2147483648
    %v93 = vmul.f32 %v91, 1.442695
    %v94 = vpow.pop %v93
    %v95 = vmul.f32 %v92, 1.442695
    %v96 = vpow.pop %v95
    %v97 = vadd.f32 %v94, 1.0
    %v98 = vadd.f32 %v96, 1.0
    %v99 = vrcp.pop %v97
    %v100 = vmul.f32 1.0, %v99
    %v101 = vrcp.pop %v98
    %v102 = vmul.f32 1.0, %v101
    %v103 = vmul.f32 %v85, %v100
    %v104 = vmul.f32 %v88, %v102
    %107 = vrot.lane.b32.xlu0 %v85, 64
    %v108 = vpop.permute.xlu0 %107
    %109 = vrot.lane.b32.xlu0 %v88, 64
    %v110 = vpop.permute.xlu0 %109
    %v113 = vmul.f32 %v103, %v108
    %v114 = vmul.f32 %v104, %v110
    %v115 = vpack.c.bf16 %v114, %v113
    %v124 = vunpack.c.l.b16 %v25
    %v125 = vunpack.c.l.b16 %v26
    %v126 = vunpack.c.l.b16 %v27
    %v127 = vunpack.c.l.b16 %v28
    %v128 = vunpack.c.l.b16 %v29
    %v129 = vunpack.c.l.b16 %v30
    %v130 = vunpack.c.l.b16 %v31
    %v131 = vunpack.c.l.b16 %v32
    %v132 = vpack.c.b16 %v125, %v124
    %v133 = vpack.c.b16 %v127, %v126
    %v134 = vpack.c.b16 %v129, %v128
    %v135 = vpack.c.b16 %v131, %v130
    %vm140 = vcmask 523264
    %v142 = vsel %vm140, %v115, 0
    %144 = vmatprep.subr.bf16.mxu0 0
    %145 = vmatpush1.bf16.msra.mxu0 %v132
    %146 = vmatprep.subr.bf16.mxu0 0
    %147 = vmatpush1.bf16.msra.mxu0 %v133
    %148 = vmatprep.subr.bf16.mxu0 0
    %149 = vmatpush1.bf16.msra.mxu0 %v134
    %150 = vmatprep.subr.bf16.mxu0 0
    %151 = vmatpush1.bf16.msra.mxu0 %v135
    %152 = vmatprep.subr.bf16.mxu0 0
    %153 = vmatpush1.bf16.msra.mxu0 0
    %154 = vmatprep.subr.bf16.mxu0 0
    %155 = vmatpush1.bf16.msra.mxu0 0
    %156 = vmatprep.subr.bf16.mxu0 0
    %157 = vmatpush1.bf16.msra.mxu0 0
    %158 = vmatprep.subr.bf16.mxu0 0
    %159 = vmatpush1.bf16.msra.mxu0 0
    %160 = vmatprep.subr.bf16.mxu0 0
    %161 = vmatpush1.bf16.msra.mxu0 0
    %162 = vmatprep.subr.bf16.mxu0 0
    %163 = vmatpush1.bf16.msra.mxu0 0
    %164 = vmatprep.subr.bf16.mxu0 0
    %165 = vmatpush1.bf16.msra.mxu0 0
    %166 = vmatprep.subr.bf16.mxu0 0
    %167 = vmatpush1.bf16.msra.mxu0 0
    %168 = vmatprep.subr.bf16.mxu0 0
    %169 = vmatpush1.bf16.msra.mxu0 0
    %170 = vmatprep.subr.bf16.mxu0 0
    %171 = vmatpush1.bf16.msra.mxu0 0
    %172 = vmatprep.subr.bf16.mxu0 0
    %173 = vmatpush1.bf16.msra.mxu0 0
    %174 = vmatprep.subr.bf16.mxu0 0
    %175 = vmatpush1.bf16.msra.mxu0 0
    %176 = vmatprep.mubr.bf16.mxu0 0
    %177 = vmatmul.mubr.bf16.gmra.mrb[0].mxu0 %v142
    %v178 = vpop.f32.mrb[0].mxu0
    %v179 = vadd.f32 0.0, %v178
    %v180 = vpop.f32.mrb[0].mxu0
    %v181 = vpop.f32.mrb[0].mxu0
    %v182 = vadd.f32 0.0, %v181
    %v183 = vpop.f32.mrb[0].mxu0
    %184 = vdwg.mxu0
    %v185 = vadd.f32 %v19, %v179
    %v186 = vadd.f32 %v20, %v182
    %187 = vst.msk [vmem:[#allocation2] sm:$0xff] %vm46, %v185
    %188 = vst.msk [vmem:[#allocation2 + $0x8] sm:$0xff] %vm46, %v186
    // Predicated region
    $region18: #{_lambda_.5} parent=1 // pred_check
      _
    $region19: #{_lambda_.5} parent=1 // pred_check_branch
      %190 = sbr.rel (0) target = $region21
    $region20: #{_lambda_.5} parent=1 // pred_region
      %s192 = ssub.s32 256, 256
      %193 = vsyncadd [#allocation3], %s192
      %s194 = sshll.u32 [#allocation2], 4
      %s195 = int_to_ptr.vmem [resolvable:$true] %s194
      %200 = dma.vmem_to_hbm [thread:$0]  %s195, 256, %s4, [#allocation3], 128, 128, 8
    $region21: #{_lambda_.5} parent=1 // pred_fallthru
      _
    // Predicated region
    $region22: #{_lambda_.5} parent=1 // pred_check
      _
    $region23: #{_lambda_.5} parent=1 // pred_check_branch
      %202 = sbr.rel (0) target = $region25
    $region24: #{_lambda_.5} parent=1 // pred_region
      %203 = dma.done [#allocation3], 256
    $region25: #{_lambda_.5} parent=1 // pred_fallthru
      _
    %204 = vsyncpa [#allocation3], 1

// kernel: _lambda_.4
$region0: #{_lambda_.4}
  #allocation0 [shape = 'u32[]', space=smem, size = 0x4, offset = 0x4, fixed_abs, tag = 'smem constant byte address 0x4 - core index']
  #allocation1 [shape = 'u32[144,128]{1,0:T(1,128)}', space=vmem, size = 0x12000, scoped, tag = 'internal scratch']
  #allocation2 [shape = 'bf16[8,32]{1,0:T(8,128)(2,1)}', space=vmem, size = 0x800, scoped, tag = 'scratch operand']
  %s0 = inlined_call_operand.vmem [shape: bf16[2,8,96], index: 0, kind: input, shape index: {}]
  %s1 = inlined_call_operand.vmem [shape: f32[8,8], index: 1, kind: input, shape index: {}]
  %s2 = inlined_call_operand.vmem [shape: f32[8,8], index: 2, kind: input, shape index: {}]
  %s3 = inlined_call_operand.vmem [shape: f32[8,8], index: 3, kind: input, shape index: {}]
  %s4 = inlined_call_operand.vmem [shape: f32[2,8,32], index: 4, kind: input, shape index: {}]
  %s5 = inlined_call_operand.vmem [shape: bf16[32,32], index: 5, kind: input, shape index: {}]
  %s6 = inlined_call_operand.vmem [shape: f32[2,8,32], index: 6, kind: output, shape index: {}]
  %s7 = sld [smem:[#allocation0]]
  $region57: #{_lambda_.4} parent=0
    _
  %s9 = ssub.s32 1, %s7
  %s10 = scalar_select 0, %s9, %s7
  loop: start=0, step=1, limit=4
  $region2: #{_lambda_.4} parent=0 // loop_pre_header
    _
  $region3: #{_lambda_.4} parent=0 // loop_header
    %s12 = sphi 0, %s16
    %p13 = scmp.ge.s32.totalorder %s12, 4
    %s19 = sphi 0, %s31
    %s20 = sphi 0, %s27
    %s21 = sphi 0, %s19
    %s22 = sphi 0, %s20
    %s23 = sphi 0, %s21
    %s24 = sphi 0, %s22
    %s34 = sphi 0, %s36
    %s37 = sphi 0, %s34
    %s38 = sphi 0, %s37
    %s54 = sphi 0, %s38
    %s58 = sphi 0, %s58
    %s60 = sphi 0, %s58
    %s61 = sphi 0, %s60
    %s75 = sphi 0, %s61
    %s79 = sphi 0, %s79
    %s81 = sphi 0, %s79
    %s82 = sphi 0, %s81
    %s96 = sphi 0, %s82
    %s102 = sphi 0, %s104
    %s105 = sphi 0, %s102
    %s106 = sphi 0, %s105
    %s122 = sphi 0, %s106
    %s130 = sphi 0, %s132
    %s133 = sphi 0, %s130
    %s134 = sphi 0, %s133
    %s150 = sphi 0, %s134
    %s154 = sphi 0, %s154
    %s156 = sphi 0, %s154
    %s157 = sphi 0, %s156
    %s171 = sphi 0, %s157
    %s179 = sphi 0, %s181
    %s182 = sphi 0, %s179
    %s183 = sphi 0, %s182
    %s199 = sphi 0, %s183
  $region4: #{_lambda_.4} parent=0 // loop_header_branch
    %15 = sbr.rel (%p13) target = $region8
  $region5: #{_lambda_.4} parent=0 // loop_body
    %s17 = ssub.s32 %s12, 1
    %s18 = ssub.s32 %s12, 2
    %s25 = sadd.s32 1, %s20
    %p26 = scmp.ge.s32.totalorder %s25, 1
    %s27 = scalar_select %p26, 0, %s25
    %s28 = sadd.s32 1, %s19
    %s29 = scalar_select %p26, %s28, %s19
    %p30 = scmp.ge.s32.totalorder %s29, 2
    %s31 = scalar_select %p30, 0, %s29
    %s32 = ssub.s32 %s19, %s31
    %p33 = scmp.eq.s32.totalorder %s32, 0
    %s35 = sadd.s32 %s34, 1
    %s36 = scalar_select %p33, %s34, %s35
    %p39 = pneg %p33
    %p40 = scmp.eq.s32.totalorder %s12, 1
    %p41 = por %p39, %p40
    %p42 = scmp.ne.s32.totalorder %s34, %s37
    %p43 = scmp.eq.s32.totalorder %s12, 0
    %p44 = por %p42, %p43
    %p45 = scmp.ne.s32.totalorder %s34, %s37
    %p46 = scmp.eq.s32.totalorder %s17, 1
    %p47 = por %p45, %p46
    %p48 = scmp.ne.s32.totalorder %s37, %s38
    %p49 = scmp.eq.s32.totalorder %s17, 0
    %p50 = por %p48, %p49
    %p51 = scmp.ne.s32.totalorder %s37, %s38
    %p52 = scmp.eq.s32.totalorder %s18, 1
    %p53 = por %p51, %p52
    %p55 = scmp.ne.s32.totalorder %s38, %s54
    %p56 = scmp.eq.s32.totalorder %s18, 0
    %p57 = por %p55, %p56
    %s59 = sadd.s32 %s58, 1
    %p62 = scmp.eq.s32.totalorder %s12, 1
    %p63 = scmp.ne.s32.totalorder %s58, %s60
    %p64 = scmp.eq.s32.totalorder %s12, 0
    %p65 = por %p63, %p64
    %p66 = scmp.ne.s32.totalorder %s58, %s60
    %p67 = scmp.eq.s32.totalorder %s17, 1
    %p68 = por %p66, %p67
    %p69 = scmp.ne.s32.totalorder %s60, %s61
    %p70 = scmp.eq.s32.totalorder %s17, 0
    %p71 = por %p69, %p70
    %p72 = scmp.ne.s32.totalorder %s60, %s61
    %p73 = scmp.eq.s32.totalorder %s18, 1
    %p74 = por %p72, %p73
    %p76 = scmp.ne.s32.totalorder %s61, %s75
    %p77 = scmp.eq.s32.totalorder %s18, 0
    %p78 = por %p76, %p77
    %s80 = sadd.s32 %s79, 1
    %p83 = scmp.eq.s32.totalorder %s12, 1
    %p84 = scmp.ne.s32.totalorder %s79, %s81
    %p85 = scmp.eq.s32.totalorder %s12, 0
    %p86 = por %p84, %p85
    %p87 = scmp.ne.s32.totalorder %s79, %s81
    %p88 = scmp.eq.s32.totalorder %s17, 1
    %p89 = por %p87, %p88
    %p90 = scmp.ne.s32.totalorder %s81, %s82
    %p91 = scmp.eq.s32.totalorder %s17, 0
    %p92 = por %p90, %p91
    %p93 = scmp.ne.s32.totalorder %s81, %s82
    %p94 = scmp.eq.s32.totalorder %s18, 1
    %p95 = por %p93, %p94
    %p97 = scmp.ne.s32.totalorder %s82, %s96
    %p98 = scmp.eq.s32.totalorder %s18, 0
    %p99 = por %p97, %p98
    %s100 = ssub.s32 %s20, %s27
    %p101 = scmp.eq.s32.totalorder %s100, 0
    %s103 = sadd.s32 %s102, 1
    %s104 = scalar_select %p101, %s102, %s103
    %p107 = pneg %p101
    %p108 = scmp.eq.s32.totalorder %s12, 1
    %p109 = por %p107, %p108
    %p110 = scmp.ne.s32.totalorder %s102, %s105
    %p111 = scmp.eq.s32.totalorder %s12, 0
    %p112 = por %p110, %p111
    %p113 = scmp.ne.s32.totalorder %s102, %s105
    %p114 = scmp.eq.s32.totalorder %s17, 1
    %p115 = por %p113, %p114
    %p116 = scmp.ne.s32.totalorder %s105, %s106
    %p117 = scmp.eq.s32.totalorder %s17, 0
    %p118 = por %p116, %p117
    %p119 = scmp.ne.s32.totalorder %s105, %s106
    %p120 = scmp.eq.s32.totalorder %s18, 1
    %p121 = por %p119, %p120
    %p123 = scmp.ne.s32.totalorder %s106, %s122
    %p124 = scmp.eq.s32.totalorder %s18, 0
    %p125 = por %p123, %p124
    %s126 = ssub.s32 %s19, %s31
    %s127 = ssub.s32 %s20, %s27
    %s128 = sor.u32 %s126, %s127
    %p129 = scmp.eq.s32.totalorder %s128, 0
    %s131 = sadd.s32 %s130, 1
    %s132 = scalar_select %p129, %s130, %s131
    %p135 = pneg %p129
    %p136 = scmp.eq.s32.totalorder %s12, 1
    %p137 = por %p135, %p136
    %p138 = scmp.ne.s32.totalorder %s130, %s133
    %p139 = scmp.eq.s32.totalorder %s12, 0
    %p140 = por %p138, %p139
    %p141 = scmp.ne.s32.totalorder %s130, %s133
    %p142 = scmp.eq.s32.totalorder %s17, 1
    %p143 = por %p141, %p142
    %p144 = scmp.ne.s32.totalorder %s133, %s134
    %p145 = scmp.eq.s32.totalorder %s17, 0
    %p146 = por %p144, %p145
    %p147 = scmp.ne.s32.totalorder %s133, %s134
    %p148 = scmp.eq.s32.totalorder %s18, 1
    %p149 = por %p147, %p148
    %p151 = scmp.ne.s32.totalorder %s134, %s150
    %p152 = scmp.eq.s32.totalorder %s18, 0
    %p153 = por %p151, %p152
    %s155 = sadd.s32 %s154, 1
    %p158 = scmp.eq.s32.totalorder %s12, 1
    %p159 = scmp.ne.s32.totalorder %s154, %s156
    %p160 = scmp.eq.s32.totalorder %s12, 0
    %p161 = por %p159, %p160
    %p162 = scmp.ne.s32.totalorder %s154, %s156
    %p163 = scmp.eq.s32.totalorder %s17, 1
    %p164 = por %p162, %p163
    %p165 = scmp.ne.s32.totalorder %s156, %s157
    %p166 = scmp.eq.s32.totalorder %s17, 0
    %p167 = por %p165, %p166
    %p168 = scmp.ne.s32.totalorder %s156, %s157
    %p169 = scmp.eq.s32.totalorder %s18, 1
    %p170 = por %p168, %p169
    %p172 = scmp.ne.s32.totalorder %s157, %s171
    %p173 = scmp.eq.s32.totalorder %s18, 0
    %p174 = por %p172, %p173
    %s175 = ssub.s32 %s19, %s31
    %s176 = ssub.s32 %s20, %s27
    %s177 = sor.u32 %s175, %s176
    %p178 = scmp.eq.s32.totalorder %s177, 0
    %s180 = sadd.s32 %s179, 1
    %s181 = scalar_select %p178, %s179, %s180
    %p184 = pneg %p178
    %p185 = scmp.eq.s32.totalorder %s12, 1
    %p186 = por %p184, %p185
    %p187 = scmp.ne.s32.totalorder %s179, %s182
    %p188 = scmp.eq.s32.totalorder %s12, 0
    %p189 = por %p187, %p188
    %p190 = scmp.ne.s32.totalorder %s179, %s182
    %p191 = scmp.eq.s32.totalorder %s17, 1
    %p192 = por %p190, %p191
    %p193 = scmp.ne.s32.totalorder %s182, %s183
    %p194 = scmp.eq.s32.totalorder %s17, 0
    %p195 = por %p193, %p194
    %p196 = scmp.ne.s32.totalorder %s182, %s183
    %p197 = scmp.eq.s32.totalorder %s18, 1
    %p198 = por %p196, %p197
    %p200 = scmp.ne.s32.totalorder %s183, %s199
    %p201 = scmp.eq.s32.totalorder %s18, 0
    %p202 = por %p200, %p201
    %p203 = scmp.le.s32.totalorder 1, %s12
    %p204 = scmp.lt.s32.totalorder %s12, 3
    %p205 = pnand %p203, %p204
    %p206 = pneg %p205
    // Predicated region
    $region9: #{_lambda_.4} parent=5 // pred_check
      _
    $region10: #{_lambda_.4} parent=5 // pred_check_branch
      %208 = sbr.rel (%p205) target = $region12
    $region11: #{_lambda_.4} parent=5 // pred_region
      %s209 = ssub.s32 %s12, 1
      // Predicated region
      $region13: #{_lambda_.4} parent=11 // pred_check
        %p210 = pneg %p71
      $region14: #{_lambda_.4} parent=11 // pred_check_branch
        %212 = sbr.rel (%p210) target = $region16
      $region15: #{_lambda_.4} parent=11 // pred_region
        _
      $region16: #{_lambda_.4} parent=11 // pred_fallthru
        _
      // Predicated region
      $region17: #{_lambda_.4} parent=11 // pred_check
        %p213 = pneg %p92
      $region18: #{_lambda_.4} parent=11 // pred_check_branch
        %215 = sbr.rel (%p213) target = $region20
      $region19: #{_lambda_.4} parent=11 // pred_region
        _
      $region20: #{_lambda_.4} parent=11 // pred_fallthru
        _
      // Predicated region
      $region21: #{_lambda_.4} parent=11 // pred_check
        %p216 = pneg %p118
      $region22: #{_lambda_.4} parent=11 // pred_check_branch
        %218 = sbr.rel (%p216) target = $region24
      $region23: #{_lambda_.4} parent=11 // pred_region
        %p219 = scmp.lt.s32.totalorder %s22, 0
        %s220 = scalar_select %p219, %s22, 0
        %s221 = smul.addr %s220, 8
        %s222 = scalar_lea.vmem %s3, %s221
      $region24: #{_lambda_.4} parent=11 // pred_fallthru
        _
      // Predicated region
      $region25: #{_lambda_.4} parent=11 // pred_check
        %p223 = pneg %p167
      $region26: #{_lambda_.4} parent=11 // pred_check_branch
        %225 = sbr.rel (%p223) target = $region28
      $region27: #{_lambda_.4} parent=11 // pred_region
        _
      $region28: #{_lambda_.4} parent=11 // pred_fallthru
        _
    $region12: #{_lambda_.4} parent=5 // pred_fallthru
      _
    %p226 = scmp.lt.s32.totalorder %s12, 2
    // Predicated region
    $region29: #{_lambda_.4} parent=5 // pred_check
      %p227 = pneg %p226
    $region30: #{_lambda_.4} parent=5 // pred_check_branch
      %229 = sbr.rel (%p227) target = $region32
    $region31: #{_lambda_.4} parent=5 // pred_region
      // Predicated region
      $region33: #{_lambda_.4} parent=31 // pred_check
        %p230 = pneg %p44
      $region34: #{_lambda_.4} parent=31 // pred_check_branch
        %232 = sbr.rel (%p230) target = $region36
      $region35: #{_lambda_.4} parent=31 // pred_region
        %p233 = scmp.lt.s32.totalorder %s19, 1
        %s234 = scalar_select %p233, %s19, 1
        %s235 = smul.addr %s234, 4
        %s236 = scalar_lea.vmem %s0, %s235
      $region36: #{_lambda_.4} parent=31 // pred_fallthru
        _
      // Predicated region
      $region37: #{_lambda_.4} parent=31 // pred_check
        %p237 = pneg %p140
      $region38: #{_lambda_.4} parent=31 // pred_check_branch
        %239 = sbr.rel (%p237) target = $region40
      $region39: #{_lambda_.4} parent=31 // pred_region
        %p240 = scmp.lt.s32.totalorder %s19, 1
        %s241 = scalar_select %p240, %s19, 1
        %p242 = scmp.lt.s32.totalorder %s20, 0
        %s243 = scalar_select %p242, %s20, 0
        %s244 = sadd.s32 %s243, %s241
        %s245 = smul.addr %s244, 8
        %s246 = scalar_lea.vmem %s4, %s245
      $region40: #{_lambda_.4} parent=31 // pred_fallthru
        _
    $region32: #{_lambda_.4} parent=5 // pred_fallthru
      _
    %p247 = scmp.le.s32.totalorder 1, %s12
    %p248 = scmp.lt.s32.totalorder %s12, 3
    %p249 = pnand %p247, %p248
    %p250 = pneg %p249
    // Predicated region
    $region41: #{_lambda_.4} parent=5 // pred_check
      _
    $region42: #{_lambda_.4} parent=5 // pred_check_branch
      %252 = sbr.rel (%p249) target = $region44
    $region43: #{_lambda_.4} parent=5 // pred_region
      %s253 = ssub.s32 %s12, 1
      %p254 = scmp.lt.s32.totalorder %s21, 1
      %s255 = scalar_select %p254, %s21, 1
      %s256 = smul.addr %s255, 4
      %s257 = scalar_lea.vmem %s0, %s256
      %p258 = pneg %p50
      %p259 = pneg %p47
      %p260 = pneg %p71
      %p261 = pneg %p68
      %p262 = pneg %p92
      %p263 = pneg %p89
      %p264 = scmp.lt.s32.totalorder %s22, 0
      %s265 = scalar_select %p264, %s22, 0
      %s266 = smul.addr %s265, 8
      %s267 = scalar_lea.vmem %s3, %s266
      %p268 = pneg %p118
      %p269 = pneg %p115
      %p270 = scmp.lt.s32.totalorder %s21, 1
      %s271 = scalar_select %p270, %s21, 1
      %p272 = scmp.lt.s32.totalorder %s22, 0
      %s273 = scalar_select %p272, %s22, 0
      %s274 = sadd.s32 %s273, %s271
      %s275 = smul.addr %s274, 8
      %s276 = scalar_lea.vmem %s4, %s275
      %p277 = pneg %p146
      %p278 = pneg %p143
      %p279 = pneg %p167
      %p280 = pneg %p164
      %p281 = pneg %p195
      %p282 = pneg %p192
      %p283 = scmp.lt.s32.totalorder %s21, 1
      %s284 = scalar_select %p283, %s21, 1
      %p285 = scmp.lt.s32.totalorder %s22, 0
      %s286 = scalar_select %p285, %s22, 0
      %s287 = sadd.s32 %s286, %s284
      %s288 = smul.addr %s287, 8
      %s289 = scalar_lea.vmem %s6, %s288
      %p290 = scmp.lt.s32.totalorder %s21, 1
      %s291 = scalar_select %p290, %s21, 1
      %s292 = smul.addr %s291, 4
      %s293 = scalar_lea.vmem %s0, %s292
      %p294 = scmp.lt.s32.totalorder %s22, 0
      %s295 = scalar_select %p294, %s22, 0
      %s296 = smul.addr %s295, 8
      %s297 = scalar_lea.vmem %s3, %s296
      %p298 = scmp.lt.s32.totalorder %s21, 1
      %s299 = scalar_select %p298, %s21, 1
      %p300 = scmp.lt.s32.totalorder %s22, 0
      %s301 = scalar_select %p300, %s22, 0
      %s302 = sadd.s32 %s301, %s299
      %s303 = smul.addr %s302, 8
      %s304 = scalar_lea.vmem %s4, %s303
      %p305 = scmp.lt.s32.totalorder %s21, 1
      %s306 = scalar_select %p305, %s21, 1
      %p307 = scmp.lt.s32.totalorder %s22, 0
      %s308 = scalar_select %p307, %s22, 0
      %s309 = sadd.s32 %s308, %s306
      %s310 = smul.addr %s309, 8
      %s311 = scalar_lea.vmem %s6, %s310
      %s313 = smul.u32 %s22, 8
      %v314 = vld [vmem:[%s293] sm:$0xf]
      %s315 = sshra.s32 %s313, 3
      %s316 = sand.u32 %s313, 7
      %s317 = smul.addr %s315, 4
      %s318 = scalar_lea.vmem %s293, %s317
      %v319 = vld [vmem:[%s318] sm:$0xf]
      %v320 = vld [vmem:[%s1] sm:$0xff]
      %v321 = vld [vmem:[%s2] sm:$0xff]
      %s322 = scalar_lea.vmem %s1, %s313
      %v323 = vld [vmem:[%s322] sm:$0xff]
      %s324 = scalar_lea.vmem %s2, %s313
      %v325 = vld [vmem:[%s324] sm:$0xff]
      %v326 = vld [vmem:[%s297] sm:$0xff]
      %v327 = vunpack.c.l.bf16 %v319
      %329 = vrot.lane.b32.xlu0 %v327, 124
      %v330 = vpop.permute.xlu0 %329
      %332 = vrot.lane.b32.xlu0 %v327, 4
      %v333 = vpop.permute.xlu0 %332
      %vm335 = vcmask 31744
      %v336 = vsel %vm335, %v330, %v333
      %v337 = vmul.f32 %v327, %v323
      %v338 = vmul.f32 %v336, %v325
      %v339 = vadd.f32 %v337, %v338
      %v340 = vmul.f32 %v339, 0.35355338
      %v341 = vpack.c.bf16 %v340, %v340
      %v342 = vunpack.c.l.bf16 %v314
      %344 = vrot.lane.b32.xlu0 %v342, 92
      %v345 = vpop.permute.xlu0 %344
      %347 = vrot.lane.b32.xlu0 %v342, 100
      %v348 = vpop.permute.xlu0 %347
      %v350 = vsel %vm335, %v345, %v348
      %352 = vrot.lane.b32.xlu0 %v320, 32
      %v353 = vpop.permute.xlu0 %352
      %v355 = vmul.f32 %v342, %v353
      %v356 = vmul.f32 %v350, %v321
      %358 = vrot.lane.b32.xlu0 %v356, 32
      %v359 = vpop.permute.xlu0 %358
      %v361 = vadd.f32 %v355, %v359
      %v362 = vpack.c.bf16 %v361, %v361
      %364 = vrot.lane.b32.xlu0 %v362, 96
      %v365 = vpop.permute.xlu0 %364
      %vm366 = vcmask 64512
      %v368 = vsel %vm366, %v341, 0
      %v371 = vsel %vm366, %v365, 0
      %373 = vmatprep.subr.bf16.mxu0 0
      %374 = vmatpush1.bf16.xpose.msra.mxu0 %v371
      %375 = vmatprep.subr.bf16.mxu0 0
      %376 = vmatpush1.bf16.xpose.msra.mxu0 0
      %377 = vmatprep.subr.bf16.mxu0 0
      %378 = vmatpush1.bf16.xpose.msra.mxu0 0
      %379 = vmatprep.subr.bf16.mxu0 0
      %380 = vmatpush1.bf16.xpose.msra.mxu0 0
      %381 = vmatprep.subr.bf16.mxu0 0
      %382 = vmatpush1.bf16.xpose.msra.mxu0 0
      %383 = vmatprep.subr.bf16.mxu0 0
      %384 = vmatpush1.bf16.xpose.msra.mxu0 0
      %385 = vmatprep.subr.bf16.mxu0 0
      %386 = vmatpush1.bf16.xpose.msra.mxu0 0
      %387 = vmatprep.subr.bf16.mxu0 0
      %388 = vmatpush1.bf16.xpose.msra.mxu0 0
      %389 = vmatprep.subr.bf16.mxu0 0
      %390 = vmatpush1.bf16.xpose.msra.mxu0 0
      %391 = vmatprep.subr.bf16.mxu0 0
      %392 = vmatpush1.bf16.xpose.msra.mxu0 0
      %393 = vmatprep.subr.bf16.mxu0 0
      %394 = vmatpush1.bf16.xpose.msra.mxu0 0
      %395 = vmatprep.subr.bf16.mxu0 0
      %396 = vmatpush1.bf16.xpose.msra.mxu0 0
      %397 = vmatprep.subr.bf16.mxu0 0
      %398 = vmatpush1.bf16.xpose.msra.mxu0 0
      %399 = vmatprep.subr.bf16.mxu0 0
      %400 = vmatpush1.bf16.xpose.msra.mxu0 0
      %401 = vmatprep.subr.bf16.mxu0 0
      %402 = vmatpush1.bf16.xpose.msra.mxu0 0
      %403 = vmatprep.subr.bf16.mxu0 0
      %404 = vmatpush1.bf16.xpose.msra.mxu0 0
      %405 = vmatprep.mubr.bf16.mxu0 0
      %406 = vmatmul.mubr.bf16.gmra.mrb[0].mxu0 %v368
      %v407 = vpop.f32.mrb[0].mxu0
      %v408 = vadd.f32 %v326, %v407
      %v409 = vpop.f32.mrb[0].mxu0
      %v410 = vpop.f32.mrb[0].mxu0
      %v411 = vpop.f32.mrb[0].mxu0
      %412 = vdwg.mxu0
      %v413 = vsel %vm366, %v408, -inf
      %414 = vmax.xlane.f32.xlu0 %v413
      %v415 = vpop.xlane.xlu0 %414
      %v416 = vsub.f32 %v408, %v415
      %v417 = vmul.f32 %v416, 1.442695
      %v418 = vpow.pop %v417
      %v419 = vsel %vm366, %v418, 0.0
      %420 = vadd.xlane.f32.xlu0 %v419
      %v421 = vpop.xlane.xlu0 %420
      %v422 = vpack.c.bf16 %v418, %v418
      %v424 = vunpack.c.l.b16 %v314
      %v425 = vpack.c.b16 %v424, %v424
      %426 = vrot.lane.b32.xlu0 %v425, 64
      %v427 = vpop.permute.xlu0 %426
      %v429 = vsel %vm366, %v422, 0
      %vm431 = vcmask 1043456
      %v433 = vsel %vm431, %v427, 0
      %435 = vmatprep.subr.bf16.mxu0 0
      %436 = vmatpush1.bf16.msra.mxu0 %v433
      %437 = vmatprep.subr.bf16.mxu0 0
      %438 = vmatpush1.bf16.msra.mxu0 0
      %439 = vmatprep.subr.bf16.mxu0 0
      %440 = vmatpush1.bf16.msra.mxu0 0
      %441 = vmatprep.subr.bf16.mxu0 0
      %442 = vmatpush1.bf16.msra.mxu0 0
      %443 = vmatprep.subr.bf16.mxu0 0
      %444 = vmatpush1.bf16.msra.mxu0 0
      %445 = vmatprep.subr.bf16.mxu0 0
      %446 = vmatpush1.bf16.msra.mxu0 0
      %447 = vmatprep.subr.bf16.mxu0 0
      %448 = vmatpush1.bf16.msra.mxu0 0
      %449 = vmatprep.subr.bf16.mxu0 0
      %450 = vmatpush1.bf16.msra.mxu0 0
      %451 = vmatprep.subr.bf16.mxu0 0
      %452 = vmatpush1.bf16.msra.mxu0 0
      %453 = vmatprep.subr.bf16.mxu0 0
      %454 = vmatpush1.bf16.msra.mxu0 0
      %455 = vmatprep.subr.bf16.mxu0 0
      %456 = vmatpush1.bf16.msra.mxu0 0
      %457 = vmatprep.subr.bf16.mxu0 0
      %458 = vmatpush1.bf16.msra.mxu0 0
      %459 = vmatprep.subr.bf16.mxu0 0
      %460 = vmatpush1.bf16.msra.mxu0 0
      %461 = vmatprep.subr.bf16.mxu0 0
      %462 = vmatpush1.bf16.msra.mxu0 0
      %463 = vmatprep.subr.bf16.mxu0 0
      %464 = vmatpush1.bf16.msra.mxu0 0
      %465 = vmatprep.subr.bf16.mxu0 0
      %466 = vmatpush1.bf16.msra.mxu0 0
      %467 = vmatprep.mubr.bf16.mxu0 0
      %468 = vmatmul.mubr.bf16.gmra.mrb[0].mxu0 %v429
      %v469 = vpop.f32.mrb[0].mxu0
      %v470 = vadd.f32 0.0, %v469
      %v471 = vpop.f32.mrb[0].mxu0
      %v472 = vpop.f32.mrb[0].mxu0
      %v473 = vpop.f32.mrb[0].mxu0
      %474 = vdwg.mxu0
      %v475 = vrcp.pop %v421
      %v476 = vmul.f32 %v470, %v475
      %v477 = vpack.c.bf16 %v476, %v476
      %vm478 = vcmask 60416
      %479 = vst.msk [vmem:[#allocation2] sm:$0xf] %vm478, %v477
      %480 = vrot.lane.b32.xlu0 %v327, 116
      %v481 = vpop.permute.xlu0 %480
      %v483 = vsel %vm335, %v481, %v330
      %485 = vrot.lane.b32.xlu0 %v323, 8
      %v486 = vpop.permute.xlu0 %485
      %v488 = vmul.f32 %v327, %v486
      %v489 = vmul.f32 %v483, %v325
      %491 = vrot.lane.b32.xlu0 %v489, 8
      %v492 = vpop.permute.xlu0 %491
      %v494 = vadd.f32 %v488, %v492
      %v495 = vmul.f32 %v494, 0.35355338
      %v496 = vpack.c.bf16 %v495, %v495
      %497 = vrot.lane.b32.xlu0 %v342, 84
      %v498 = vpop.permute.xlu0 %497
      %v500 = vsel %vm335, %v498, %v345
      %501 = vrot.lane.b32.xlu0 %v320, 40
      %v502 = vpop.permute.xlu0 %501
      %v504 = vmul.f32 %v342, %v502
      %v505 = vmul.f32 %v500, %v321
      %507 = vrot.lane.b32.xlu0 %v505, 40
      %v508 = vpop.permute.xlu0 %507
      %v510 = vadd.f32 %v504, %v508
      %v511 = vpack.c.bf16 %v510, %v510
      %513 = vrot.lane.b32.xlu0 %v496, 120
      %v514 = vpop.permute.xlu0 %513
      %516 = vrot.lane.b32.xlu0 %v511, 88
      %v517 = vpop.permute.xlu0 %516
      %v519 = vsel %vm366, %v514, 0
      %v522 = vsel %vm366, %v517, 0
      %524 = vmatprep.subr.bf16.mxu0 0
      %525 = vmatpush1.bf16.xpose.msra.mxu0 %v522
      %526 = vmatprep.subr.bf16.mxu0 0
      %527 = vmatpush1.bf16.xpose.msra.mxu0 0
      %528 = vmatprep.subr.bf16.mxu0 0
      %529 = vmatpush1.bf16.xpose.msra.mxu0 0
      %530 = vmatprep.subr.bf16.mxu0 0
      %531 = vmatpush1.bf16.xpose.msra.mxu0 0
      %532 = vmatprep.subr.bf16.mxu0 0
      %533 = vmatpush1.bf16.xpose.msra.mxu0 0
      %534 = vmatprep.subr.bf16.mxu0 0
      %535 = vmatpush1.bf16.xpose.msra.mxu0 0
      %536 = vmatprep.subr.bf16.mxu0 0
      %537 = vmatpush1.bf16.xpose.msra.mxu0 0
      %538 = vmatprep.subr.bf16.mxu0 0
      %539 = vmatpush1.bf16.xpose.msra.mxu0 0
      %540 = vmatprep.subr.bf16.mxu0 0
      %541 = vmatpush1.bf16.xpose.msra.mxu0 0
      %542 = vmatprep.subr.bf16.mxu0 0
      %543 = vmatpush1.bf16.xpose.msra.mxu0 0
      %544 = vmatprep.subr.bf16.mxu0 0
      %545 = vmatpush1.bf16.xpose.msra.mxu0 0
      %546 = vmatprep.subr.bf16.mxu0 0
      %547 = vmatpush1.bf16.xpose.msra.mxu0 0
      %548 = vmatprep.subr.bf16.mxu0 0
      %549 = vmatpush1.bf16.xpose.msra.mxu0 0
      %550 = vmatprep.subr.bf16.mxu0 0
      %551 = vmatpush1.bf16.xpose.msra.mxu0 0
      %552 = vmatprep.subr.bf16.mxu0 0
      %553 = vmatpush1.bf16.xpose.msra.mxu0 0
      %554 = vmatprep.subr.bf16.mxu0 0
      %555 = vmatpush1.bf16.xpose.msra.mxu0 0
      %556 = vmatprep.mubr.bf16.mxu0 0
      %557 = vmatmul.mubr.bf16.gmra.mrb[0].mxu0 %v519
      %v558 = vpop.f32.mrb[0].mxu0
      %v559 = vadd.f32 %v326, %v558
      %v560 = vpop.f32.mrb[0].mxu0
      %v561 = vpop.f32.mrb[0].mxu0
      %v562 = vpop.f32.mrb[0].mxu0
      %563 = vdwg.mxu0
      %v564 = vsel %vm366, %v559, -inf
      %565 = vmax.xlane.f32.xlu0 %v564
      %v566 = vpop.xlane.xlu0 %565
      %v567 = vsub.f32 %v559, %v566
      %v568 = vmul.f32 %v567, 1.442695
      %v569 = vpow.pop %v568
      %v570 = vsel %vm366, %v569, 0.0
      %571 = vadd.xlane.f32.xlu0 %v570
      %v572 = vpop.xlane.xlu0 %571
      %v573 = vpack.c.bf16 %v569, %v569
      %574 = vrot.lane.b32.xlu0 %v425, 56
      %v575 = vpop.permute.xlu0 %574
      %v577 = vsel %vm366, %v573, 0
      %v580 = vsel %vm431, %v575, 0
      %582 = vmatprep.subr.bf16.mxu0 0
      %583 = vmatpush1.bf16.msra.mxu0 %v580
      %584 = vmatprep.subr.bf16.mxu0 0
      %585 = vmatpush1.bf16.msra.mxu0 0
      %586 = vmatprep.subr.bf16.mxu0 0
      %587 = vmatpush1.bf16.msra.mxu0 0
      %588 = vmatprep.subr.bf16.mxu0 0
      %589 = vmatpush1.bf16.msra.mxu0 0
      %590 = vmatprep.subr.bf16.mxu0 0
      %591 = vmatpush1.bf16.msra.mxu0 0
      %592 = vmatprep.subr.bf16.mxu0 0
      %593 = vmatpush1.bf16.msra.mxu0 0
      %594 = vmatprep.subr.bf16.mxu0 0
      %595 = vmatpush1.bf16.msra.mxu0 0
      %596 = vmatprep.subr.bf16.mxu0 0
      %597 = vmatpush1.bf16.msra.mxu0 0
      %598 = vmatprep.subr.bf16.mxu0 0
      %599 = vmatpush1.bf16.msra.mxu0 0
      %600 = vmatprep.subr.bf16.mxu0 0
      %601 = vmatpush1.bf16.msra.mxu0 0
      %602 = vmatprep.subr.bf16.mxu0 0
      %603 = vmatpush1.bf16.msra.mxu0 0
      %604 = vmatprep.subr.bf16.mxu0 0
      %605 = vmatpush1.bf16.msra.mxu0 0
      %606 = vmatprep.subr.bf16.mxu0 0
      %607 = vmatpush1.bf16.msra.mxu0 0
      %608 = vmatprep.subr.bf16.mxu0 0
      %609 = vmatpush1.bf16.msra.mxu0 0
      %610 = vmatprep.subr.bf16.mxu0 0
      %611 = vmatpush1.bf16.msra.mxu0 0
      %612 = vmatprep.subr.bf16.mxu0 0
      %613 = vmatpush1.bf16.msra.mxu0 0
      %614 = vmatprep.mubr.bf16.mxu0 0
      %615 = vmatmul.mubr.bf16.gmra.mrb[0].mxu0 %v577
      %v616 = vpop.f32.mrb[0].mxu0
      %v617 = vadd.f32 0.0, %v616
      %v618 = vpop.f32.mrb[0].mxu0
      %v619 = vpop.f32.mrb[0].mxu0
      %v620 = vpop.f32.mrb[0].mxu0
      %621 = vdwg.mxu0
      %v622 = vrcp.pop %v572
      %v623 = vmul.f32 %v617, %v622
      %v624 = vpack.c.bf16 %v623, %v623
      %v626 = vunpack.c.l.b16 %v624
      %v627 = vpack.c.b16 %v626, %v626
      %628 = vrot.lane.b32.xlu0 %v627, 8
      %v629 = vpop.permute.xlu0 %628
      %vm631 = vcmask 126016
      %632 = vst.msk [vmem:[#allocation2] sm:$0xf] %vm631, %v629
      %633 = vrot.lane.b32.xlu0 %v327, 108
      %v634 = vpop.permute.xlu0 %633
      %v636 = vsel %vm335, %v634, %v481
      %637 = vrot.lane.b32.xlu0 %v323, 16
      %v638 = vpop.permute.xlu0 %637
      %v640 = vmul.f32 %v327, %v638
      %v641 = vmul.f32 %v636, %v325
      %643 = vrot.lane.b32.xlu0 %v641, 16
      %v644 = vpop.permute.xlu0 %643
      %v646 = vadd.f32 %v640, %v644
      %v647 = vmul.f32 %v646, 0.35355338
      %v648 = vpack.c.bf16 %v647, %v647
      %649 = vrot.lane.b32.xlu0 %v342, 76
      %v650 = vpop.permute.xlu0 %649
      %v652 = vsel %vm335, %v650, %v498
      %653 = vrot.lane.b32.xlu0 %v320, 48
      %v654 = vpop.permute.xlu0 %653
      %v656 = vmul.f32 %v342, %v654
      %v657 = vmul.f32 %v652, %v321
      %659 = vrot.lane.b32.xlu0 %v657, 48
      %v660 = vpop.permute.xlu0 %659
      %v662 = vadd.f32 %v656, %v660
      %v663 = vpack.c.bf16 %v662, %v662
      %665 = vrot.lane.b32.xlu0 %v648, 112
      %v666 = vpop.permute.xlu0 %665
      %668 = vrot.lane.b32.xlu0 %v663, 80
      %v669 = vpop.permute.xlu0 %668
      %v671 = vsel %vm366, %v666, 0
      %v674 = vsel %vm366, %v669, 0
      %676 = vmatprep.subr.bf16.mxu0 0
      %677 = vmatpush1.bf16.xpose.msra.mxu0 %v674
      %678 = vmatprep.subr.bf16.mxu0 0
      %679 = vmatpush1.bf16.xpose.msra.mxu0 0
      %680 = vmatprep.subr.bf16.mxu0 0
      %681 = vmatpush1.bf16.xpose.msra.mxu0 0
      %682 = vmatprep.subr.bf16.mxu0 0
      %683 = vmatpush1.bf16.xpose.msra.mxu0 0
      %684 = vmatprep.subr.bf16.mxu0 0
      %685 = vmatpush1.bf16.xpose.msra.mxu0 0
      %686 = vmatprep.subr.bf16.mxu0 0
      %687 = vmatpush1.bf16.xpose.msra.mxu0 0
      %688 = vmatprep.subr.bf16.mxu0 0
      %689 = vmatpush1.bf16.xpose.msra.mxu0 0
      %690 = vmatprep.subr.bf16.mxu0 0
      %691 = vmatpush1.bf16.xpose.msra.mxu0 0
      %692 = vmatprep.subr.bf16.mxu0 0
      %693 = vmatpush1.bf16.xpose.msra.mxu0 0
      %694 = vmatprep.subr.bf16.mxu0 0
      %695 = vmatpush1.bf16.xpose.msra.mxu0 0
      %696 = vmatprep.subr.bf16.mxu0 0
      %697 = vmatpush1.bf16.xpose.msra.mxu0 0
      %698 = vmatprep.subr.bf16.mxu0 0
      %699 = vmatpush1.bf16.xpose.msra.mxu0 0
      %700 = vmatprep.subr.bf16.mxu0 0
      %701 = vmatpush1.bf16.xpose.msra.mxu0 0
      %702 = vmatprep.subr.bf16.mxu0 0
      %703 = vmatpush1.bf16.xpose.msra.mxu0 0
      %704 = vmatprep.subr.bf16.mxu0 0
      %705 = vmatpush1.bf16.xpose.msra.mxu0 0
      %706 = vmatprep.subr.bf16.mxu0 0
      %707 = vmatpush1.bf16.xpose.msra.mxu0 0
      %708 = vmatprep.mubr.bf16.mxu0 0
      %709 = vmatmul.mubr.bf16.gmra.mrb[0].mxu0 %v671
      %v710 = vpop.f32.mrb[0].mxu0
      %v711 = vadd.f32 %v326, %v710
      %v712 = vpop.f32.mrb[0].mxu0
      %v713 = vpop.f32.mrb[0].mxu0
      %v714 = vpop.f32.mrb[0].mxu0
      %715 = vdwg.mxu0
      %v716 = vsel %vm366, %v711, -inf
      %717 = vmax.xlane.f32.xlu0 %v716
      %v718 = vpop.xlane.xlu0 %717
      %v719 = vsub.f32 %v711, %v718
      %v720 = vmul.f32 %v719, 1.442695
      %v721 = vpow.pop %v720
      %v722 = vsel %vm366, %v721, 0.0
      %723 = vadd.xlane.f32.xlu0 %v722
      %v724 = vpop.xlane.xlu0 %723
      %v725 = vpack.c.bf16 %v721, %v721
      %726 = vrot.lane.b32.xlu0 %v425, 48
      %v727 = vpop.permute.xlu0 %726
      %v729 = vsel %vm366, %v725, 0
      %v732 = vsel %vm431, %v727, 0
      %734 = vmatprep.subr.bf16.mxu0 0
      %735 = vmatpush1.bf16.msra.mxu0 %v732
      %736 = vmatprep.subr.bf16.mxu0 0
      %737 = vmatpush1.bf16.msra.mxu0 0
      %738 = vmatprep.subr.bf16.mxu0 0
      %739 = vmatpush1.bf16.msra.mxu0 0
      %740 = vmatprep.subr.bf16.mxu0 0
      %741 = vmatpush1.bf16.msra.mxu0 0
      %742 = vmatprep.subr.bf16.mxu0 0
      %743 = vmatpush1.bf16.msra.mxu0 0
      %744 = vmatprep.subr.bf16.mxu0 0
      %745 = vmatpush1.bf16.msra.mxu0 0
      %746 = vmatprep.subr.bf16.mxu0 0
      %747 = vmatpush1.bf16.msra.mxu0 0
      %748 = vmatprep.subr.bf16.mxu0 0
      %749 = vmatpush1.bf16.msra.mxu0 0
      %750 = vmatprep.subr.bf16.mxu0 0
      %751 = vmatpush1.bf16.msra.mxu0 0
      %752 = vmatprep.subr.bf16.mxu0 0
      %753 = vmatpush1.bf16.msra.mxu0 0
      %754 = vmatprep.subr.bf16.mxu0 0
      %755 = vmatpush1.bf16.msra.mxu0 0
      %756 = vmatprep.subr.bf16.mxu0 0
      %757 = vmatpush1.bf16.msra.mxu0 0
      %758 = vmatprep.subr.bf16.mxu0 0
      %759 = vmatpush1.bf16.msra.mxu0 0
      %760 = vmatprep.subr.bf16.mxu0 0
      %761 = vmatpush1.bf16.msra.mxu0 0
      %762 = vmatprep.subr.bf16.mxu0 0
      %763 = vmatpush1.bf16.msra.mxu0 0
      %764 = vmatprep.subr.bf16.mxu0 0
      %765 = vmatpush1.bf16.msra.mxu0 0
      %766 = vmatprep.mubr.bf16.mxu0 0
      %767 = vmatmul.mubr.bf16.gmra.mrb[0].mxu0 %v729
      %v768 = vpop.f32.mrb[0].mxu0
      %v769 = vadd.f32 0.0, %v768
      %v770 = vpop.f32.mrb[0].mxu0
      %v771 = vpop.f32.mrb[0].mxu0
      %v772 = vpop.f32.mrb[0].mxu0
      %773 = vdwg.mxu0
      %v774 = vrcp.pop %v724
      %v775 = vmul.f32 %v769, %v774
      %v776 = vpack.c.bf16 %v775, %v775
      %v778 = vunpack.c.l.b16 %v776
      %v779 = vpack.c.b16 %v778, %v778
      %780 = vrot.lane.b32.xlu0 %v779, 16
      %v781 = vpop.permute.xlu0 %780
      %vm783 = vcmask 191616
      %784 = vst.msk [vmem:[#allocation2] sm:$0xf] %vm783, %v781
      %785 = vrot.lane.b32.xlu0 %v327, 100
      %v786 = vpop.permute.xlu0 %785
      %v788 = vsel %vm335, %v786, %v634
      %789 = vrot.lane.b32.xlu0 %v323, 24
      %v790 = vpop.permute.xlu0 %789
      %v792 = vmul.f32 %v327, %v790
      %v793 = vmul.f32 %v788, %v325
      %795 = vrot.lane.b32.xlu0 %v793, 24
      %v796 = vpop.permute.xlu0 %795
      %v798 = vadd.f32 %v792, %v796
      %v799 = vmul.f32 %v798, 0.35355338
      %v800 = vpack.c.bf16 %v799, %v799
      %801 = vrot.lane.b32.xlu0 %v342, 68
      %v802 = vpop.permute.xlu0 %801
      %v804 = vsel %vm335, %v802, %v650
      %805 = vrot.lane.b32.xlu0 %v320, 56
      %v806 = vpop.permute.xlu0 %805
      %v808 = vmul.f32 %v342, %v806
      %v809 = vmul.f32 %v804, %v321
      %811 = vrot.lane.b32.xlu0 %v809, 56
      %v812 = vpop.permute.xlu0 %811
      %v814 = vadd.f32 %v808, %v812
      %v815 = vpack.c.bf16 %v814, %v814
      %817 = vrot.lane.b32.xlu0 %v800, 104
      %v818 = vpop.permute.xlu0 %817
      %820 = vrot.lane.b32.xlu0 %v815, 72
      %v821 = vpop.permute.xlu0 %820
      %v823 = vsel %vm366, %v818, 0
      %v826 = vsel %vm366, %v821, 0
      %828 = vmatprep.subr.bf16.mxu0 0
      %829 = vmatpush1.bf16.xpose.msra.mxu0 %v826
      %830 = vmatprep.subr.bf16.mxu0 0
      %831 = vmatpush1.bf16.xpose.msra.mxu0 0
      %832 = vmatprep.subr.bf16.mxu0 0
      %833 = vmatpush1.bf16.xpose.msra.mxu0 0
      %834 = vmatprep.subr.bf16.mxu0 0
      %835 = vmatpush1.bf16.xpose.msra.mxu0 0
      %836 = vmatprep.subr.bf16.mxu0 0
      %837 = vmatpush1.bf16.xpose.msra.mxu0 0
      %838 = vmatprep.subr.bf16.mxu0 0
      %839 = vmatpush1.bf16.xpose.msra.mxu0 0
      %840 = vmatprep.subr.bf16.mxu0 0
      %841 = vmatpush1.bf16.xpose.msra.mxu0 0
      %842 = vmatprep.subr.bf16.mxu0 0
      %843 = vmatpush1.bf16.xpose.msra.mxu0 0
      %844 = vmatprep.subr.bf16.mxu0 0
      %845 = vmatpush1.bf16.xpose.msra.mxu0 0
      %846 = vmatprep.subr.bf16.mxu0 0
      %847 = vmatpush1.bf16.xpose.msra.mxu0 0
      %848 = vmatprep.subr.bf16.mxu0 0
      %849 = vmatpush1.bf16.xpose.msra.mxu0 0
      %850 = vmatprep.subr.bf16.mxu0 0
      %851 = vmatpush1.bf16.xpose.msra.mxu0 0
      %852 = vmatprep.subr.bf16.mxu0 0
      %853 = vmatpush1.bf16.xpose.msra.mxu0 0
      %854 = vmatprep.subr.bf16.mxu0 0
      %855 = vmatpush1.bf16.xpose.msra.mxu0 0
      %856 = vmatprep.subr.bf16.mxu0 0
      %857 = vmatpush1.bf16.xpose.msra.mxu0 0
      %858 = vmatprep.subr.bf16.mxu0 0
      %859 = vmatpush1.bf16.xpose.msra.mxu0 0
      %860 = vmatprep.mubr.bf16.mxu0 0
      %861 = vmatmul.mubr.bf16.gmra.mrb[0].mxu0 %v823
      %v862 = vpop.f32.mrb[0].mxu0
      %v863 = vadd.f32 %v326, %v862
      %v864 = vpop.f32.mrb[0].mxu0
      %v865 = vpop.f32.mrb[0].mxu0
      %v866 = vpop.f32.mrb[0].mxu0
      %867 = vdwg.mxu0
      %v868 = vsel %vm366, %v863, -inf
      %869 = vmax.xlane.f32.xlu0 %v868
      %v870 = vpop.xlane.xlu0 %869
      %v871 = vsub.f32 %v863, %v870
      %v872 = vmul.f32 %v871, 1.442695
      %v873 = vpow.pop %v872
      %v874 = vsel %vm366, %v873, 0.0
      %875 = vadd.xlane.f32.xlu0 %v874
      %v876 = vpop.xlane.xlu0 %875
      %v877 = vpack.c.bf16 %v873, %v873
      %878 = vrot.lane.b32.xlu0 %v425, 40
      %v879 = vpop.permute.xlu0 %878
      %v881 = vsel %vm366, %v877, 0
      %v884 = vsel %vm431, %v879, 0
      %886 = vmatprep.subr.bf16.mxu0 0
      %887 = vmatpush1.bf16.msra.mxu0 %v884
      %888 = vmatprep.subr.bf16.mxu0 0
      %889 = vmatpush1.bf16.msra.mxu0 0
      %890 = vmatprep.subr.bf16.mxu0 0
      %891 = vmatpush1.bf16.msra.mxu0 0
      %892 = vmatprep.subr.bf16.mxu0 0
      %893 = vmatpush1.bf16.msra.mxu0 0
      %894 = vmatprep.subr.bf16.mxu0 0
      %895 = vmatpush1.bf16.msra.mxu0 0
      %896 = vmatprep.subr.bf16.mxu0 0
      %897 = vmatpush1.bf16.msra.mxu0 0
      %898 = vmatprep.subr.bf16.mxu0 0
      %899 = vmatpush1.bf16.msra.mxu0 0
      %900 = vmatprep.subr.bf16.mxu0 0
      %901 = vmatpush1.bf16.msra.mxu0 0
      %902 = vmatprep.subr.bf16.mxu0 0
      %903 = vmatpush1.bf16.msra.mxu0 0
      %904 = vmatprep.subr.bf16.mxu0 0
      %905 = vmatpush1.bf16.msra.mxu0 0
      %906 = vmatprep.subr.bf16.mxu0 0
      %907 = vmatpush1.bf16.msra.mxu0 0
      %908 = vmatprep.subr.bf16.mxu0 0
      %909 = vmatpush1.bf16.msra.mxu0 0
      %910 = vmatprep.subr.bf16.mxu0 0
      %911 = vmatpush1.bf16.msra.mxu0 0
      %912 = vmatprep.subr.bf16.mxu0 0
      %913 = vmatpush1.bf16.msra.mxu0 0
      %914 = vmatprep.subr.bf16.mxu0 0
      %915 = vmatpush1.bf16.msra.mxu0 0
      %916 = vmatprep.subr.bf16.mxu0 0
      %917 = vmatpush1.bf16.msra.mxu0 0
      %918 = vmatprep.mubr.bf16.mxu0 0
      %919 = vmatmul.mubr.bf16.gmra.mrb[0].mxu0 %v881
      %v920 = vpop.f32.mrb[0].mxu0
      %v921 = vadd.f32 0.0, %v920
      %v922 = vpop.f32.mrb[0].mxu0
      %v923 = vpop.f32.mrb[0].mxu0
      %v924 = vpop.f32.mrb[0].mxu0
      %925 = vdwg.mxu0
      %v926 = vrcp.pop %v876
      %v927 = vmul.f32 %v921, %v926
      %v928 = vpack.c.bf16 %v927, %v927
      %v930 = vunpack.c.l.b16 %v928
      %v931 = vpack.c.b16 %v930, %v930
      %932 = vrot.lane.b32.xlu0 %v931, 24
      %v933 = vpop.permute.xlu0 %932
      %vm935 = vcmask 257216
      %936 = vst.msk [vmem:[#allocation2] sm:$0xf] %vm935, %v933
      %v937 = vld [vmem:[#allocation2] sm:$0xf]
      %v938 = vld [vmem:[%s5] sm:$0xf]
      %v939 = vld [vmem:[%s5 + $0x4] sm:$0xf]
      %v940 = vld [vmem:[%s5 + $0x8] sm:$0xf]
      %v941 = vld [vmem:[%s5 + $0xc] sm:$0xf]
      %v946 = vunpack.c.l.b16 %v938
      %v947 = vunpack.c.l.b16 %v939
      %v948 = vunpack.c.l.b16 %v940
      %v949 = vunpack.c.l.b16 %v941
      %v950 = vpack.c.b16 %v947, %v946
      %v951 = vpack.c.b16 %v949, %v948
      %vm954 = vcmask 261120
      %v956 = vsel %vm954, %v937, 0
      %958 = vmatprep.subr.bf16.mxu0 0
      %959 = vmatpush1.bf16.msra.mxu0 %v950
      %960 = vmatprep.subr.bf16.mxu0 0
      %961 = vmatpush1.bf16.msra.mxu0 %v951
      %962 = vmatprep.subr.bf16.mxu0 0
      %963 = vmatpush1.bf16.msra.mxu0 0
      %964 = vmatprep.subr.bf16.mxu0 0
      %965 = vmatpush1.bf16.msra.mxu0 0
      %966 = vmatprep.subr.bf16.mxu0 0
      %967 = vmatpush1.bf16.msra.mxu0 0
      %968 = vmatprep.subr.bf16.mxu0 0
      %969 = vmatpush1.bf16.msra.mxu0 0
      %970 = vmatprep.subr.bf16.mxu0 0
      %971 = vmatpush1.bf16.msra.mxu0 0
      %972 = vmatprep.subr.bf16.mxu0 0
      %973 = vmatpush1.bf16.msra.mxu0 0
      %974 = vmatprep.subr.bf16.mxu0 0
      %975 = vmatpush1.bf16.msra.mxu0 0
      %976 = vmatprep.subr.bf16.mxu0 0
      %977 = vmatpush1.bf16.msra.mxu0 0
      %978 = vmatprep.subr.bf16.mxu0 0
      %979 = vmatpush1.bf16.msra.mxu0 0
      %980 = vmatprep.subr.bf16.mxu0 0
      %981 = vmatpush1.bf16.msra.mxu0 0
      %982 = vmatprep.subr.bf16.mxu0 0
      %983 = vmatpush1.bf16.msra.mxu0 0
      %984 = vmatprep.subr.bf16.mxu0 0
      %985 = vmatpush1.bf16.msra.mxu0 0
      %986 = vmatprep.subr.bf16.mxu0 0
      %987 = vmatpush1.bf16.msra.mxu0 0
      %988 = vmatprep.subr.bf16.mxu0 0
      %989 = vmatpush1.bf16.msra.mxu0 0
      %990 = vmatprep.mubr.bf16.mxu0 0
      %991 = vmatmul.mubr.bf16.gmra.mrb[0].mxu0 %v956
      %v992 = vpop.f32.mrb[0].mxu0
      %v993 = vadd.f32 0.0, %v992
      %v994 = vpop.f32.mrb[0].mxu0
      %v995 = vpop.f32.mrb[0].mxu0
      %v996 = vpop.f32.mrb[0].mxu0
      %997 = vdwg.mxu0
      %v998 = vld [vmem:[%s304] sm:$0xff]
      %v999 = vadd.f32 %v998, %v993
      %1000 = vst.msk [vmem:[%s311] sm:$0xff] %vm954, %v999
      %p1001 = scmp.lt.s32.totalorder %s21, 1
      %s1002 = scalar_select %p1001, %s21, 1
      %p1003 = scmp.lt.s32.totalorder %s22, 0
      %s1004 = scalar_select %p1003, %s22, 0
      %s1005 = sadd.s32 %s1004, %s1002
      %s1006 = smul.addr %s1005, 8
      %s1007 = scalar_lea.vmem %s6, %s1006
      // Predicated region
      $region45: #{_lambda_.4} parent=43 // pred_check
        %p1008 = pneg %p192
      $region46: #{_lambda_.4} parent=43 // pred_check_branch
        %1010 = sbr.rel (%p1008) target = $region48
      $region47: #{_lambda_.4} parent=43 // pred_region
        _
      $region48: #{_lambda_.4} parent=43 // pred_fallthru
        _
    $region44: #{_lambda_.4} parent=5 // pred_fallthru
      _
    %p1011 = scmp.le.s32.totalorder 2, %s12
    // Predicated region
    $region49: #{_lambda_.4} parent=5 // pred_check
      %p1012 = pneg %p1011
    $region50: #{_lambda_.4} parent=5 // pred_check_branch
      %1014 = sbr.rel (%p1012) target = $region52
    $region51: #{_lambda_.4} parent=5 // pred_region
      %s1015 = ssub.s32 %s12, 2
      // Predicated region
      $region53: #{_lambda_.4} parent=51 // pred_check
        %p1016 = pneg %p198
      $region54: #{_lambda_.4} parent=51 // pred_check_branch
        %1018 = sbr.rel (%p1016) target = $region56
      $region55: #{_lambda_.4} parent=51 // pred_region
        %p1019 = scmp.lt.s32.totalorder %s23, 1
        %s1020 = scalar_select %p1019, %s23, 1
        %p1021 = scmp.lt.s32.totalorder %s24, 0
        %s1022 = scalar_select %p1021, %s24, 0
        %s1023 = sadd.s32 %s1022, %s1020
        %s1024 = smul.addr %s1023, 8
        %s1025 = scalar_lea.vmem %s6, %s1024
      $region56: #{_lambda_.4} parent=51 // pred_fallthru
        _
    $region52: #{_lambda_.4} parent=5 // pred_fallthru
      _
  $region6: #{_lambda_.4} parent=0 // loop_footer
    %s16 = sadd.s32 1, %s12
  $region7: #{_lambda_.4} parent=0 // loop_footer_branch
    %11 = sbr.rel target = $region3
  $region8: #{_lambda_.4} parent=0 // loop_exit
    _

</llo_original>
